<compile_context>
chip_gen: v5e
topology: v5e:2x2
jax: 0.10.0
libtpu: 0.0.40
codegen_flags: <defaults>
</compile_context>

<pallas_src>
import functools
import math

import jax
import jax.numpy as jnp
from jax.experimental import pallas as pl
from jax.experimental.pallas import tpu as pltpu

NUM_FREQ_CHANNELS = 256          # Timesteps(num_channels=256)
HALF = NUM_FREQ_CHANNELS // 2    # 128
MAX_PERIOD = 10000.0
N_MOD_BLOCKS = 6                 # final linear is always D -> 6*D, tiled in D-wide blocks


# --------------------------------------------------------------------------- kernel helpers
def _freq_table():
    """(1, 128) f32 table: exp(-ln(10000) * k / 128), k = 0..127 (downscale_freq_shift=0)."""
    k = jax.lax.broadcasted_iota(jnp.int32, (1, HALF), dimension=1).astype(jnp.float32)
    return jnp.exp(k * (-math.log(MAX_PERIOD) / HALF))


def _sin_mlp(t_col, freqs, w1c_ref, w1s_ref, b1_ref, w2_ref, b2_ref):
    """Timesteps(256, flip_sin_to_cos=True) + TimestepEmbedding (Linear -> SiLU -> Linear).

    t_col : (rows, 1) f32.  w1c/w1s are small f32 refs (precision-critical, ~0.5 MiB),
    w2 is a bf16 ref fed directly to the MXU.  Biases are (1, D) f32.  Returns (rows, D) f32.
    flip_sin_to_cos=True => proj layout is [cos | sin], realized via the pre-split w1 halves.
    """
    args = t_col * freqs                                      # (rows, 128)
    cos, sin = jnp.cos(args), jnp.sin(args)
    h = (jnp.dot(cos, w1c_ref[...], preferred_element_type=jnp.float32)
         + jnp.dot(sin, w1s_ref[...], preferred_element_type=jnp.float32)
         + b1_ref[...])
    h = h * jax.nn.sigmoid(h)                                 # SiLU in f32
    return (jnp.dot(h.astype(jnp.bfloat16), w2_ref[...],      # bf16 operands -> MXU-native
                    preferred_element_type=jnp.float32)
            + b2_ref[...])


def _write_output_block(j, cond, lw_ref, lb_ref, out_ref):
    """Blocks 0..5 hold linear(SiLU(cond)); block 6 carries embedded_timestep (= cond)."""
    @pl.when(j < N_MOD_BLOCKS)
    def _():
        h = (cond * jax.nn.sigmoid(cond)).astype(jnp.bfloat16)
        out_ref[...] = (jnp.dot(h, lw_ref[...], preferred_element_type=jnp.float32)
                        + lb_ref[...]).astype(out_ref.dtype)

    @pl.when(j == N_MOD_BLOCKS)
    def _():
        out_ref[...] = cond.astype(out_ref.dtype)


# --------------------------------------------------------------------------- fused kernels
def _adaln_single_kernel(t_ref,
                         tw1c, tw1s, tb1, tw2, tb2,
                         lw_ref, lb_ref, out_ref):
    """use_additional_conditions=False path (what AdaLayerNormSingle.forward actually hits)."""
    j = pl.program_id(0)
    freqs = _freq_table()
    # cond recomputed per grid step: ~a few MFLOPs, fully hidden under the lw-block DMA,
    # and keeps the "parallel" grid race-free (no cross-step scratch dependence).
    cond = _sin_mlp(t_ref[...], freqs, tw1c, tw1s, tb1, tw2, tb2)        # (Bpad, D) f32
    _write_output_block(j, cond, lw_ref, lb_ref, out_ref)


def _adaln_single_cond_kernel(t_ref, res_ref, ar_ref,
                              tw1c, tw1s, tb1, tw2, tb2,
                              rw1c, rw1s, rb1, rw2, rb2,
                              aw1c, aw1s, ab1, aw2, ab2,
                              lw_ref, lb_ref, out_ref):
    """use_additional_conditions=True path; all three embedders + concat + add + SiLU + 6D linear."""
    j = pl.program_id(0)
    bpad = t_ref.shape[0]
    freqs = _freq_table()
    t_emb = _sin_mlp(t_ref[...], freqs, tw1c, tw1s, tb1, tw2, tb2)        # (Bpad, 3S)
    # Batch the two resolution columns through ONE embedder pass (half the tiny MXU issues):
    # size.reshape(-1) -> emb -> reshape(B, 2S) == per-column embedding concatenated on lanes.
    # TODO(synk): fused kernel assumes resolution has 2 components and aspect_ratio 1
    #             (the PixArt-MS usage); other `dims` would need extra column slices.
    res_cols = jnp.concatenate([res_ref[:, 0:1], res_ref[:, 1:2]], axis=0)  # (2*Bpad, 1)
    e_r = _sin_mlp(res_cols, freqs, rw1c, rw1s, rb1, rw2, rb2)              # (2*Bpad, S)
    e_ar = _sin_mlp(ar_ref[...], freqs, aw1c, aw1s, ab1, aw2, ab2)          # (Bpad, S)
    # timesteps_emb + cat([res_emb, ar_emb], dim=1); S is a multiple of 128 -> lane-aligned.
    cond = t_emb + jnp.concatenate([e_r[:bpad], e_r[bpad:], e_ar], axis=-1)
    _write_output_block(j, cond, lw_ref, lb_ref, out_ref)


# --------------------------------------------------------------------------- params
def init_params(key, embedding_dim, use_additional_conditions=False, scale=0.02):
    assert embedding_dim % 3 == 0, "AdaLayerNormSingle uses size_emb_dim = embedding_dim // 3"
    size_emb_dim = embedding_dim // 3
    ks = iter(jax.random.split(key, 16))

    def mlp(dout):
        return {"w1": scale * jax.random.normal(next(ks), (NUM_FREQ_CHANNELS, dout), jnp.float32),
                "b1": scale * jax.random.normal(next(ks), (dout,), jnp.float32),
                "w2": scale * jax.random.normal(next(ks), (dout, dout), jnp.float32),
                "b2": scale * jax.random.normal(next(ks), (dout,), jnp.float32)}

    params = {
        "timestep": mlp(embedding_dim),
        "linear": {"w": scale * jax.random.normal(next(ks), (embedding_dim, 6 * embedding_dim),
                                                  jnp.float32),
                   "b": scale * jax.random.normal(next(ks), (6 * embedding_dim,), jnp.float32)},
    }
    if use_additional_conditions:
        params["resolution"] = mlp(size_emb_dim)
        params["aspect_ratio"] = mlp(size_emb_dim)
    return params


def prepare_params(params):
    """One-time prep: large matmul weights in bf16 (MXU-native), small first-layer weights
    split into cos/sin halves and kept f32, (1, D) f32 biases."""
    def prep(p):
        return {"w1c": p["w1"][:HALF].astype(jnp.float32),
                "w1s": p["w1"][HALF:].astype(jnp.float32),
                "b1": p["b1"].reshape(1, -1).astype(jnp.float32),
                "w2": p["w2"].astype(jnp.bfloat16),
                "b2": p["b2"].reshape(1, -1).astype(jnp.float32)}

    kp = {"timestep": prep(params["timestep"]),
          "linear": {"w": params["linear"]["w"].astype(jnp.bfloat16),
                     "b": params["linear"]["b"].reshape(1, -1).astype(jnp.float32)}}
    if "resolution" in params:
        kp["resolution"] = prep(params["resolution"])
        kp["aspect_ratio"] = prep(params["aspect_ratio"])
    return kp


# --------------------------------------------------------------------------- wrapper
def _normalize_condition(size, batch_size, expected_dims):
    size = jnp.asarray(size, jnp.float32)
    if size.ndim == 1:
        size = size[:, None]
    if size.shape[0] != batch_size:
        size = jnp.tile(size, (batch_size // size.shape[0], 1))
    assert size.shape == (batch_size, expected_dims), size.shape
    return size


def _const_spec(shape):
    """Full-array block with a grid-invariant index map: DMA'd once, resident across steps."""
    return pl.BlockSpec(shape, lambda j, _n=len(shape): (0,) * _n)


def _embedder_specs(p, bpad_unused=None):
    return [_const_spec(p["w1c"].shape), _const_spec(p["w1s"].shape),
            _const_spec(p["b1"].shape), _const_spec(p["w2"].shape),
            _const_spec(p["b2"].shape)]


@functools.partial(jax.jit,
                   static_argnames=("batch_size", "use_additional_conditions", "hidden_dtype"))
def adaln_single_forward(kparams, timestep, resolution, aspect_ratio, *,
                         batch_size, use_additional_conditions, hidden_dtype=jnp.float32):
    """Fused AdaLayerNormSingle forward.  Returns (linear(silu(emb)), embedded_timestep)."""
    D = kparams["timestep"]["w2"].shape[1]
    n6d = kparams["linear"]["w"].shape[1]
    assert n6d == N_MOD_BLOCKS * D
    assert D % 128 == 0, "embedding_dim must be a multiple of 128 for lane-aligned tiling"
    # bf16 activations pack two rows per sublane -> pad batch to the (16,128) bf16 min tile.
    bpad = max(16, -(-batch_size // 16) * 16)

    t_pad = jnp.zeros((bpad, 1), jnp.float32).at[:batch_size, 0].set(
        jnp.asarray(timestep, jnp.float32).reshape(-1))

    tp, lp = kparams["timestep"], kparams["linear"]
    # lw/lb are streamed one D-wide block per grid step (clamped for the emb step j==6,
    # which re-uses block 5's already-resident buffer -> no extra DMA).
    lw_spec = pl.BlockSpec((D, D), lambda j: (0, jnp.minimum(j, N_MOD_BLOCKS - 1)))
    lb_spec = pl.BlockSpec((1, D), lambda j: (0, jnp.minimum(j, N_MOD_BLOCKS - 1)))

    if use_additional_conditions:
        S = kparams["resolution"]["w2"].shape[1]
        assert D == 3 * S, ("embedding_dim must equal 3 * size_emb_dim for the "
                            "additional-conditions path")
        res = _normalize_condition(resolution, batch_size, 2)
        ar = _normalize_condition(aspect_ratio, batch_size, 1)
        res_pad = jnp.zeros((bpad, 2), jnp.float32).at[:batch_size].set(res)
        ar_pad = jnp.zeros((bpad, 1), jnp.float32).at[:batch_size].set(ar)
        rp, ap = kparams["resolution"], kparams["aspect_ratio"]
        args = (t_pad, res_pad, ar_pad,
                tp["w1c"], tp["w1s"], tp["b1"], tp["w2"], tp["b2"],
                rp["w1c"], rp["w1s"], rp["b1"], rp["w2"], rp["b2"],
                ap["w1c"], ap["w1s"], ap["b1"], ap["w2"], ap["b2"],
                lp["w"], lp["b"])
        in_specs = ([_const_spec((bpad, 1)), _const_spec((bpad, 2)), _const_spec((bpad, 1))]
                    + _embedder_specs(tp) + _embedder_specs(rp) + _embedder_specs(ap)
                    + [lw_spec, lb_spec])
        kernel = _adaln_single_cond_kernel
        embed_flops = (2 * bpad * (NUM_FREQ_CHANNELS * D + D * D)
                       + 2 * (3 * bpad) * (NUM_FREQ_CHANNELS * S + S * S))
        n_rows = 4 * bpad
    else:
        args = (t_pad,
                tp["w1c"], tp["w1s"], tp["b1"], tp["w2"], tp["b2"],
                lp["w"], lp["b"])
        in_specs = [_const_spec((bpad, 1))] + _embedder_specs(tp) + [lw_spec, lb_spec]
        kernel = _adaln_single_kernel
        embed_flops = 2 * bpad * (NUM_FREQ_CHANNELS * D + D * D)
        n_rows = bpad

    n_steps = N_MOD_BLOCKS + 1          # 6 modulation blocks + 1 emb block
    flops = n_steps * embed_flops + 2 * bpad * D * n6d
    transcendentals = n_steps * (HALF + n_rows * 2 * HALF + (n_rows + bpad) * D)
    bytes_accessed = (sum(a.size * a.dtype.itemsize for a in args)
                      + bpad * n_steps * D * jnp.dtype(hidden_dtype).itemsize)

    # Single combined output: blocks 0..5 = modulation (6D lanes), block 6 = embedded_timestep.
    # Every grid step owns a disjoint output block, so the grid axis is safely "parallel"
    # (splits the dominant lw weight stream across both v7x TensorCores).
    out = pl.pallas_call(
        kernel,
        out_shape=jax.ShapeDtypeStruct((bpad, n_steps * D), hidden_dtype),
        grid=(n_steps,),
        in_specs=in_specs,
        out_specs=pl.BlockSpec((bpad, D), lambda j: (0, j)),
        compiler_params=pltpu.CompilerParams(
            dimension_semantics=("parallel",),
            vmem_limit_bytes=48 * 1024 * 1024),
        cost_estimate=pl.CostEstimate(flops=flops, transcendentals=transcendentals,
                                      bytes_accessed=bytes_accessed),
    )(*args)

    # Padded rows (t=0) are garbage by construction; single slice at the very end.
    mod = out[:batch_size, :n6d]
    emb = out[:batch_size, n6d:]
    return mod, emb


# --------------------------------------------------------------------------- pure-JAX reference
def _ref_sin_mlp(t_flat, p):
    k = jnp.arange(HALF, dtype=jnp.float32)
    freqs = jnp.exp(-math.log(MAX_PERIOD) * k / HALF)
    arg = t_flat.astype(jnp.float32)[:, None] * freqs[None, :]
    emb = jnp.concatenate([jnp.cos(arg), jnp.sin(arg)], axis=-1)       # flip_sin_to_cos=True
    w1 = jnp.concatenate([p["w1c"], p["w1s"]], axis=0).astype(jnp.float32)
    h = emb @ w1 + p["b1"]
    h = h * jax.nn.sigmoid(h)
    return h @ p["w2"].astype(jnp.float32) + p["b2"]


def _ref_forward(kparams, timestep, resolution, aspect_ratio, batch_size,
                 use_additional_conditions):
    t = jnp.asarray(timestep, jnp.float32).reshape(-1)
    cond = _ref_sin_mlp(t, kparams["timestep"])
    if use_additional_conditions:
        res = _normalize_condition(resolution, batch_size, 2)
        ar = _normalize_condition(aspect_ratio, batch_size, 1)
        re = _ref_sin_mlp(res.reshape(-1), kparams["resolution"]).reshape(batch_size, -1)
        ae = _ref_sin_mlp(ar.reshape(-1), kparams["aspect_ratio"]).reshape(batch_size, -1)
        cond = cond + jnp.concatenate([re, ae], axis=1)
    h = cond * jax.nn.sigmoid(cond)
    mod = h @ kparams["linear"]["w"].astype(jnp.float32) + kparams["linear"]["b"]
    return mod, cond


# --------------------------------------------------------------------------- demo / check
if __name__ == "__main__":
    embedding_dim = 384            # D; size_emb_dim = 128; modulation width = 6*D = 2304
    batch_size = 2
    # Kernel uses bf16 MXU operands for the big matmuls; reference keeps f32 activations.
    ATOL, RTOL = 2e-3, 1e-2

    key = jax.random.PRNGKey(0)
    k_p0, k_p1, k_t, k_r, k_a = jax.random.split(key, 5)

    timestep = jax.random.uniform(k_t, (batch_size,), jnp.float32, 0.0, 1000.0)
    resolution = jax.random.uniform(k_r, (batch_size, 2), jnp.float32, 256.0, 1024.0)
    aspect_ratio = jax.random.uniform(k_a, (batch_size, 1), jnp.float32, 0.5, 2.0)

    # --- path AdaLayerNormSingle.forward actually uses (resolution/aspect_ratio = None) ---
    kparams = prepare_params(init_params(k_p0, embedding_dim, use_additional_conditions=False))
    mod, emb = adaln_single_forward(kparams, timestep, None, None,
                                    batch_size=batch_size, use_additional_conditions=False)
    mod, emb = jax.block_until_ready((mod, emb))
    ref_mod, ref_emb = _ref_forward(kparams, timestep, None, None, batch_size, False)
    assert mod.shape == (batch_size, 6 * embedding_dim) and emb.shape == (batch_size, embedding_dim)
    assert jnp.allclose(emb, ref_emb, atol=ATOL, rtol=RTOL), "embedded_timestep mismatch"
    assert jnp.allclose(mod, ref_mod, atol=ATOL, rtol=RTOL), "modulation output mismatch"

    # --- PixArt-MS path with additional size / aspect-ratio conditioning (fully fused) ---
    kparams_c = prepare_params(init_params(k_p1, embedding_dim, use_additional_conditions=True))
    mod_c, emb_c = adaln_single_forward(kparams_c, timestep, resolution, aspect_ratio,
                                        batch_size=batch_size, use_additional_conditions=True)
    mod_c, emb_c = jax.block_until_ready((mod_c, emb_c))
    ref_mod_c, ref_emb_c = _ref_forward(kparams_c, timestep, resolution, aspect_ratio,
                                        batch_size, True)
    assert jnp.allclose(emb_c, ref_emb_c, atol=ATOL, rtol=RTOL), "cond embedded_timestep mismatch"
    assert jnp.allclose(mod_c, ref_mod_c, atol=ATOL, rtol=RTOL), "cond modulation mismatch"

    print("KERNEL_OK")
</pallas_src>

<mosaic_0001>
module attributes {stable_mosaic.version = 11 : i64} {
  func.func @_adaln_single_kernel(%arg0: i32, %arg1: memref<16x1xf32, #tpu.memory_space<vmem>>, %arg2: memref<128x384xf32, #tpu.memory_space<vmem>>, %arg3: memref<128x384xf32, #tpu.memory_space<vmem>>, %arg4: memref<1x384xf32, #tpu.memory_space<vmem>>, %arg5: memref<384x384xbf16, #tpu.memory_space<vmem>>, %arg6: memref<1x384xf32, #tpu.memory_space<vmem>>, %arg7: memref<384x384xbf16, #tpu.memory_space<vmem>>, %arg8: memref<1x384xf32, #tpu.memory_space<vmem>>, %arg9: memref<16x384xf32, #tpu.memory_space<vmem>>) attributes {dimension_semantics = [#tpu.dimension_semantics<parallel>], iteration_bounds = array<i64: 7>, scalar_prefetch = 0 : i64, scratch_operands = 0 : i64, tpu.core_type = #tpu.core_type<tc>, window_params = [{pipeline_mode = #tpu.pipeline_mode<synchronous>, transform_indices = @transform_0, window_bounds = array<i64: 16, 1>}, {pipeline_mode = #tpu.pipeline_mode<synchronous>, transform_indices = @transform_1, window_bounds = array<i64: 128, 384>}, {pipeline_mode = #tpu.pipeline_mode<synchronous>, transform_indices = @transform_2, window_bounds = array<i64: 128, 384>}, {pipeline_mode = #tpu.pipeline_mode<synchronous>, transform_indices = @transform_3, window_bounds = array<i64: 1, 384>}, {pipeline_mode = #tpu.pipeline_mode<synchronous>, transform_indices = @transform_4, window_bounds = array<i64: 384, 384>}, {pipeline_mode = #tpu.pipeline_mode<synchronous>, transform_indices = @transform_5, window_bounds = array<i64: 1, 384>}, {transform_indices = @transform_6, window_bounds = array<i64: 384, 384>}, {transform_indices = @transform_7, window_bounds = array<i64: 1, 384>}, {transform_indices = @transform_8, window_bounds = array<i64: 16, 384>}]} {
    %0 = tpu.iota {dimensions = array<i32: 1>} : vector<1x128xi32>
    %1 = arith.sitofp %0 : vector<1x128xi32> to vector<1x128xf32>
    %cst = arith.constant -0.0719557852 : f32
    %2 = vector.broadcast %cst : f32 to vector<1x128xf32>
    %3 = arith.mulf %1, %2 : vector<1x128xf32>
    %4 = math.exp %3 : vector<1x128xf32>
    %c0 = arith.constant 0 : index
    %c0_0 = arith.constant 0 : index
    %5 = vector.load %arg1[%c0, %c0_0] : memref<16x1xf32, #tpu.memory_space<vmem>>, vector<16x1xf32>
    %6 = vector.broadcast %5 : vector<16x1xf32> to vector<16x128xf32>
    %7 = vector.broadcast %4 : vector<1x128xf32> to vector<16x128xf32>
    %8 = arith.mulf %6, %7 : vector<16x128xf32>
    %9 = math.cos %8 : vector<16x128xf32>
    %10 = math.sin %8 : vector<16x128xf32>
    %c0_1 = arith.constant 0 : index
    %c0_2 = arith.constant 0 : index
    %11 = vector.load %arg2[%c0_1, %c0_2] : memref<128x384xf32, #tpu.memory_space<vmem>>, vector<128x384xf32>
    %cst_3 = arith.constant dense<0.000000e+00> : vector<16x384xf32>
    %12 = tpu.matmul %9, %11, %cst_3 {dimension_numbers = #tpu.dot_dimension_numbers<[1], [0], [0], [1], [0, 0, 1, 1], [], []>} : vector<16x128xf32>, vector<128x384xf32>, vector<16x384xf32> -> vector<16x384xf32>
    %c0_4 = arith.constant 0 : index
    %c0_5 = arith.constant 0 : index
    %13 = vector.load %arg3[%c0_4, %c0_5] : memref<128x384xf32, #tpu.memory_space<vmem>>, vector<128x384xf32>
    %cst_6 = arith.constant dense<0.000000e+00> : vector<16x384xf32>
    %14 = tpu.matmul %10, %13, %cst_6 {dimension_numbers = #tpu.dot_dimension_numbers<[1], [0], [0], [1], [0, 0, 1, 1], [], []>} : vector<16x128xf32>, vector<128x384xf32>, vector<16x384xf32> -> vector<16x384xf32>
    %15 = arith.addf %12, %14 : vector<16x384xf32>
    %c0_7 = arith.constant 0 : index
    %c0_8 = arith.constant 0 : index
    %16 = vector.load %arg4[%c0_7, %c0_8] : memref<1x384xf32, #tpu.memory_space<vmem>>, vector<1x384xf32>
    %17 = vector.broadcast %16 : vector<1x384xf32> to vector<16x384xf32>
    %18 = arith.addf %15, %17 : vector<16x384xf32>
    %19 = arith.negf %18 : vector<16x384xf32>
    %20 = math.exp %19 : vector<16x384xf32>
    %cst_9 = arith.constant 1.000000e+00 : f32
    %21 = vector.broadcast %cst_9 : f32 to vector<16x384xf32>
    %22 = arith.addf %21, %20 : vector<16x384xf32>
    %23 = arith.divf %21, %22 : vector<16x384xf32>
    %24 = arith.mulf %18, %23 : vector<16x384xf32>
    %25 = arith.truncf %24 : vector<16x384xf32> to vector<16x384xbf16>
    %c0_10 = arith.constant 0 : index
    %c0_11 = arith.constant 0 : index
    %26 = vector.load %arg5[%c0_10, %c0_11] : memref<384x384xbf16, #tpu.memory_space<vmem>>, vector<384x384xbf16>
    %cst_12 = arith.constant dense<0.000000e+00> : vector<16x384xf32>
    %27 = tpu.matmul %25, %26, %cst_12 {dimension_numbers = #tpu.dot_dimension_numbers<[1], [0], [0], [1], [0, 0, 1, 1], [], []>} : vector<16x384xbf16>, vector<384x384xbf16>, vector<16x384xf32> -> vector<16x384xf32>
    %c0_13 = arith.constant 0 : index
    %c0_14 = arith.constant 0 : index
    %28 = vector.load %arg6[%c0_13, %c0_14] : memref<1x384xf32, #tpu.memory_space<vmem>>, vector<1x384xf32>
    %29 = vector.broadcast %28 : vector<1x384xf32> to vector<16x384xf32>
    %30 = arith.addf %27, %29 : vector<16x384xf32>
    %c6_i32 = arith.constant 6 : i32
    %31 = arith.cmpi slt, %arg0, %c6_i32 : i32
    %32 = arith.extui %31 : i1 to i32
    %c0_i32 = arith.constant 0 : i32
    %33 = arith.cmpi ne, %32, %c0_i32 : i32
    scf.if %33 {
      %37 = arith.negf %30 : vector<16x384xf32>
      %38 = math.exp %37 : vector<16x384xf32>
      %cst_17 = arith.constant 1.000000e+00 : f32
      %39 = vector.broadcast %cst_17 : f32 to vector<16x384xf32>
      %40 = arith.addf %39, %38 : vector<16x384xf32>
      %41 = arith.divf %39, %40 : vector<16x384xf32>
      %42 = arith.mulf %30, %41 : vector<16x384xf32>
      %43 = arith.truncf %42 : vector<16x384xf32> to vector<16x384xbf16>
      %c0_18 = arith.constant 0 : index
      %c0_19 = arith.constant 0 : index
      %44 = vector.load %arg7[%c0_18, %c0_19] : memref<384x384xbf16, #tpu.memory_space<vmem>>, vector<384x384xbf16>
      %cst_20 = arith.constant dense<0.000000e+00> : vector<16x384xf32>
      %45 = tpu.matmul %43, %44, %cst_20 {dimension_numbers = #tpu.dot_dimension_numbers<[1], [0], [0], [1], [0, 0, 1, 1], [], []>} : vector<16x384xbf16>, vector<384x384xbf16>, vector<16x384xf32> -> vector<16x384xf32>
      %c0_21 = arith.constant 0 : index
      %c0_22 = arith.constant 0 : index
      %46 = vector.load %arg8[%c0_21, %c0_22] : memref<1x384xf32, #tpu.memory_space<vmem>>, vector<1x384xf32>
      %47 = vector.broadcast %46 : vector<1x384xf32> to vector<16x384xf32>
      %48 = arith.addf %45, %47 : vector<16x384xf32>
      %c0_23 = arith.constant 0 : index
      %c0_24 = arith.constant 0 : index
      %49 = vector.load %arg9[%c0_23, %c0_24] : memref<16x384xf32, #tpu.memory_space<vmem>>, vector<16x384xf32>
      tpu.vector_store %arg9[%c0_23, %c0_24], %48 {strides = array<i32>} : memref<16x384xf32, #tpu.memory_space<vmem>>, vector<16x384xf32>,
    } else {
    }
    %c6_i32_15 = arith.constant 6 : i32
    %34 = arith.cmpi eq, %arg0, %c6_i32_15 : i32
    %35 = arith.extui %34 : i1 to i32
    %c0_i32_16 = arith.constant 0 : i32
    %36 = arith.cmpi ne, %35, %c0_i32_16 : i32
    scf.if %36 {
      %c0_17 = arith.constant 0 : index
      %c0_18 = arith.constant 0 : index
      %37 = vector.load %arg9[%c0_17, %c0_18] : memref<16x384xf32, #tpu.memory_space<vmem>>, vector<16x384xf32>
      tpu.vector_store %arg9[%c0_17, %c0_18], %30 {strides = array<i32>} : memref<16x384xf32, #tpu.memory_space<vmem>>, vector<16x384xf32>,
    } else {
    }
    return
  }
  func.func @transform_0(%arg0: i32) -> (i32, i32) {
    %c0_i32 = arith.constant 0 : i32
    %c0_i32_0 = arith.constant 0 : i32
    %c0_i32_1 = arith.constant 0 : i32
    return %c0_i32, %c0_i32_0 : i32, i32
  }
  func.func @transform_1(%arg0: i32) -> (i32, i32) {
    %c0_i32 = arith.constant 0 : i32
    %c0_i32_0 = arith.constant 0 : i32
    %c0_i32_1 = arith.constant 0 : i32
    return %c0_i32, %c0_i32_0 : i32, i32
  }
  func.func @transform_2(%arg0: i32) -> (i32, i32) {
    %c0_i32 = arith.constant 0 : i32
    %c0_i32_0 = arith.constant 0 : i32
    %c0_i32_1 = arith.constant 0 : i32
    return %c0_i32, %c0_i32_0 : i32, i32
  }
  func.func @transform_3(%arg0: i32) -> (i32, i32) {
    %c0_i32 = arith.constant 0 : i32
    %c0_i32_0 = arith.constant 0 : i32
    %c0_i32_1 = arith.constant 0 : i32
    return %c0_i32, %c0_i32_0 : i32, i32
  }
  func.func @transform_4(%arg0: i32) -> (i32, i32) {
    %c0_i32 = arith.constant 0 : i32
    %c0_i32_0 = arith.constant 0 : i32
    %c0_i32_1 = arith.constant 0 : i32
    return %c0_i32, %c0_i32_0 : i32, i32
  }
  func.func @transform_5(%arg0: i32) -> (i32, i32) {
    %c0_i32 = arith.constant 0 : i32
    %c0_i32_0 = arith.constant 0 : i32
    %c0_i32_1 = arith.constant 0 : i32
    return %c0_i32, %c0_i32_0 : i32, i32
  }
  func.func @transform_6(%arg0: i32) -> (i32, i32) {
    %c5_i32 = arith.constant 5 : i32
    %0 = arith.minsi %arg0, %c5_i32 : i32
    %c0_i32 = arith.constant 0 : i32
    %c0_i32_0 = arith.constant 0 : i32
    return %c0_i32, %0 : i32, i32
  }
  func.func @transform_7(%arg0: i32) -> (i32, i32) {
    %c5_i32 = arith.constant 5 : i32
    %0 = arith.minsi %arg0, %c5_i32 : i32
    %c0_i32 = arith.constant 0 : i32
    %c0_i32_0 = arith.constant 0 : i32
    return %c0_i32, %0 : i32, i32
  }
  func.func @transform_8(%arg0: i32) -> (i32, i32) {
    %c0_i32 = arith.constant 0 : i32
    %c0_i32_0 = arith.constant 0 : i32
    return %c0_i32, %arg0 : i32, i32
  }
}

</mosaic_0001>

<llo_original>
// kernel: adaln_single_forward.1
$region0: #{adaln_single_forward.1}
  #allocation0 [shape = 'u32[]', space=smem, size = 0x4, offset = 0x4, fixed_abs, tag = 'smem constant byte address 0x4 - core index']
  #allocation1 [shape = 'u32[72,128]{1,0:T(1,128)}', space=vmem, size = 0x9000, scoped, tag = 'internal scratch']
  %s0 = inlined_call_operand.vmem [shape: f32[16,1], index: 0, kind: input, shape index: {}]
  %s1 = inlined_call_operand.hbm [shape: f32[128,384], index: 1, kind: input, shape index: {}]
  %s2 = inlined_call_operand.hbm [shape: f32[128,384], index: 2, kind: input, shape index: {}]
  %s3 = inlined_call_operand.hbm [shape: f32[1,384], index: 3, kind: input, shape index: {}]
  %s4 = inlined_call_operand.hbm [shape: bf16[384,384], index: 4, kind: input, shape index: {}]
  %s5 = inlined_call_operand.hbm [shape: f32[1,384], index: 5, kind: input, shape index: {}]
  %s6 = inlined_call_operand.hbm [shape: bf16[384,2304], index: 6, kind: input, shape index: {}]
  %s7 = inlined_call_operand.hbm [shape: f32[1,2304], index: 7, kind: input, shape index: {}]
  %s8 = inlined_call_operand.vmem [shape: f32[16,2688], index: 8, kind: output, shape index: {}]
  %s9 = sld [smem:[#allocation0]]
  $region120: #{adaln_single_forward.1} parent=0
    _
  %s11 = ssub.s32 1, %s9
  %s12 = scalar_select 0, %s11, %s9
  $region1: #{adaln_single_forward.1} parent=0
    #allocation2 [shape = 'u8[196608]{0}', space=vmem, size = 0x30000, scoped, tag = 'input window, operand 1, single buffered']
    #allocation3 [shape = 's32[2]{0}', space=sflag, size = 0x8, scoped, tag = 'scoped memory for adaln_single_forward.1']
    #allocation4 [shape = 'u8[196608]{0}', space=vmem, size = 0x30000, scoped, tag = 'input window, operand 2, single buffered']
    #allocation5 [shape = 's32[1]{0}', space=sflag, size = 0x4, scoped, tag = 'scoped memory for adaln_single_forward.1']
    #allocation6 [shape = 'u8[1536]{0}', space=vmem, size = 0x800, scoped, tag = 'input window, operand 3, single buffered']
    #allocation7 [shape = 'u8[294912]{0}', space=vmem, size = 0x48000, scoped, tag = 'input window, operand 4, single buffered']
    #allocation8 [shape = 's32[1]{0}', space=sflag, size = 0x4, scoped, tag = 'scoped memory for adaln_single_forward.1']
    #allocation9 [shape = 'u8[1536]{0}', space=vmem, size = 0x800, scoped, tag = 'input window, operand 5, single buffered']
    #allocation10 [shape = 'u8[589824]{0}', space=vmem, size = 0x90000, scoped, tag = 'input window, operand 6']
    #allocation11 [shape = 's32[2]{0}', space=sflag, size = 0x8, scoped, tag = 'scoped memory for adaln_single_forward.1']
    #allocation12 [shape = 'u8[3072]{0}', space=vmem, size = 0xc00, scoped, tag = 'input window, operand 7']
    #allocation13 [shape = 'u8[49152]{0}', space=vmem, size = 0xc000, scoped, tag = 'output window, operand 0']
    %13 = vsyncpa [#allocation3], 0
    %14 = vsyncpa [#allocation5], 0
    %15 = vsyncpa [#allocation8], 0
    %16 = vsyncpa [#allocation11], 0
    %s17 = scalar_lea.sflag [#allocation11], 1
    %18 = vsyncpa %s17, 0
    loop: start=0, step=1, limit=9
    $region2: #{adaln_single_forward.1} parent=1 // loop_pre_header
      _
    $region3: #{adaln_single_forward.1} parent=1 // loop_header
      %s20 = sphi 0, %s24
      %p21 = scmp.ge.s32.totalorder %s20, 9
      %s28 = sphi 0, %s28
      %s30 = sphi 0, %s28
      %s31 = sphi 0, %s30
      %s45 = sphi 0, %s31
      %s49 = sphi 0, %s49
      %s51 = sphi 0, %s49
      %s52 = sphi 0, %s51
      %s66 = sphi 0, %s52
      %s70 = sphi 0, %s70
      %s72 = sphi 0, %s70
      %s73 = sphi 0, %s72
      %s87 = sphi 0, %s73
      %s91 = sphi 0, %s91
      %s93 = sphi 0, %s91
      %s94 = sphi 0, %s93
      %s108 = sphi 0, %s94
      %s112 = sphi 0, %s112
      %s114 = sphi 0, %s112
      %s115 = sphi 0, %s114
      %s129 = sphi 0, %s115
      %s133 = sphi 0, %s133
      %s135 = sphi 0, %s133
      %s136 = sphi 0, %s135
      %s150 = sphi 0, %s136
      %s160 = sphi 0, %s162
      %s163 = sphi 0, %s160
      %s164 = sphi 0, %s163
      %s180 = sphi 0, %s164
      %s190 = sphi 0, %s192
      %s193 = sphi 0, %s190
      %s194 = sphi 0, %s193
      %s210 = sphi 0, %s194
      %s216 = sphi 0, %s218
      %s219 = sphi 0, %s216
      %s220 = sphi 0, %s219
      %s236 = sphi 0, %s220
    $region4: #{adaln_single_forward.1} parent=1 // loop_header_branch
      %23 = sbr.rel (%p21) target = $region8
    $region5: #{adaln_single_forward.1} parent=1 // loop_body
      %s25 = ssub.s32 %s20, 1
      %s26 = ssub.s32 %s20, 2
      %s27 = sadd.s32 %s20, 1
      %s29 = sadd.s32 %s28, 1
      %p32 = scmp.eq.s32.totalorder %s20, 6
      %p33 = scmp.ne.s32.totalorder %s28, %s30
      %p34 = scmp.eq.s32.totalorder %s20, 0
      %p35 = por %p33, %p34
      %p36 = scmp.ne.s32.totalorder %s28, %s30
      %p37 = scmp.eq.s32.totalorder %s25, 6
      %p38 = por %p36, %p37
      %p39 = scmp.ne.s32.totalorder %s30, %s31
      %p40 = scmp.eq.s32.totalorder %s25, 0
      %p41 = por %p39, %p40
      %p42 = scmp.ne.s32.totalorder %s30, %s31
      %p43 = scmp.eq.s32.totalorder %s26, 6
      %p44 = por %p42, %p43
      %p46 = scmp.ne.s32.totalorder %s31, %s45
      %p47 = scmp.eq.s32.totalorder %s26, 0
      %p48 = por %p46, %p47
      %s50 = sadd.s32 %s49, 1
      %p53 = scmp.eq.s32.totalorder %s20, 6
      %p54 = scmp.ne.s32.totalorder %s49, %s51
      %p55 = scmp.eq.s32.totalorder %s20, 0
      %p56 = por %p54, %p55
      %p57 = scmp.ne.s32.totalorder %s49, %s51
      %p58 = scmp.eq.s32.totalorder %s25, 6
      %p59 = por %p57, %p58
      %p60 = scmp.ne.s32.totalorder %s51, %s52
      %p61 = scmp.eq.s32.totalorder %s25, 0
      %p62 = por %p60, %p61
      %p63 = scmp.ne.s32.totalorder %s51, %s52
      %p64 = scmp.eq.s32.totalorder %s26, 6
      %p65 = por %p63, %p64
      %p67 = scmp.ne.s32.totalorder %s52, %s66
      %p68 = scmp.eq.s32.totalorder %s26, 0
      %p69 = por %p67, %p68
      %s71 = sadd.s32 %s70, 1
      %p74 = scmp.eq.s32.totalorder %s20, 6
      %p75 = scmp.ne.s32.totalorder %s70, %s72
      %p76 = scmp.eq.s32.totalorder %s20, 0
      %p77 = por %p75, %p76
      %p78 = scmp.ne.s32.totalorder %s70, %s72
      %p79 = scmp.eq.s32.totalorder %s25, 6
      %p80 = por %p78, %p79
      %p81 = scmp.ne.s32.totalorder %s72, %s73
      %p82 = scmp.eq.s32.totalorder %s25, 0
      %p83 = por %p81, %p82
      %p84 = scmp.ne.s32.totalorder %s72, %s73
      %p85 = scmp.eq.s32.totalorder %s26, 6
      %p86 = por %p84, %p85
      %p88 = scmp.ne.s32.totalorder %s73, %s87
      %p89 = scmp.eq.s32.totalorder %s26, 0
      %p90 = por %p88, %p89
      %s92 = sadd.s32 %s91, 1
      %p95 = scmp.eq.s32.totalorder %s20, 6
      %p96 = scmp.ne.s32.totalorder %s91, %s93
      %p97 = scmp.eq.s32.totalorder %s20, 0
      %p98 = por %p96, %p97
      %p99 = scmp.ne.s32.totalorder %s91, %s93
      %p100 = scmp.eq.s32.totalorder %s25, 6
      %p101 = por %p99, %p100
      %p102 = scmp.ne.s32.totalorder %s93, %s94
      %p103 = scmp.eq.s32.totalorder %s25, 0
      %p104 = por %p102, %p103
      %p105 = scmp.ne.s32.totalorder %s93, %s94
      %p106 = scmp.eq.s32.totalorder %s26, 6
      %p107 = por %p105, %p106
      %p109 = scmp.ne.s32.totalorder %s94, %s108
      %p110 = scmp.eq.s32.totalorder %s26, 0
      %p111 = por %p109, %p110
      %s113 = sadd.s32 %s112, 1
      %p116 = scmp.eq.s32.totalorder %s20, 6
      %p117 = scmp.ne.s32.totalorder %s112, %s114
      %p118 = scmp.eq.s32.totalorder %s20, 0
      %p119 = por %p117, %p118
      %p120 = scmp.ne.s32.totalorder %s112, %s114
      %p121 = scmp.eq.s32.totalorder %s25, 6
      %p122 = por %p120, %p121
      %p123 = scmp.ne.s32.totalorder %s114, %s115
      %p124 = scmp.eq.s32.totalorder %s25, 0
      %p125 = por %p123, %p124
      %p126 = scmp.ne.s32.totalorder %s114, %s115
      %p127 = scmp.eq.s32.totalorder %s26, 6
      %p128 = por %p126, %p127
      %p130 = scmp.ne.s32.totalorder %s115, %s129
      %p131 = scmp.eq.s32.totalorder %s26, 0
      %p132 = por %p130, %p131
      %s134 = sadd.s32 %s133, 1
      %p137 = scmp.eq.s32.totalorder %s20, 6
      %p138 = scmp.ne.s32.totalorder %s133, %s135
      %p139 = scmp.eq.s32.totalorder %s20, 0
      %p140 = por %p138, %p139
      %p141 = scmp.ne.s32.totalorder %s133, %s135
      %p142 = scmp.eq.s32.totalorder %s25, 6
      %p143 = por %p141, %p142
      %p144 = scmp.ne.s32.totalorder %s135, %s136
      %p145 = scmp.eq.s32.totalorder %s25, 0
      %p146 = por %p144, %p145
      %p147 = scmp.ne.s32.totalorder %s135, %s136
      %p148 = scmp.eq.s32.totalorder %s26, 6
      %p149 = por %p147, %p148
      %p151 = scmp.ne.s32.totalorder %s136, %s150
      %p152 = scmp.eq.s32.totalorder %s26, 0
      %p153 = por %p151, %p152
      %p154 = scmp.lt.s32.totalorder %s20, 5
      %s155 = scalar_select %p154, %s20, 5
      %p156 = scmp.lt.s32.totalorder %s27, 5
      %s157 = scalar_select %p156, %s27, 5
      %s158 = ssub.s32 %s155, %s157
      %p159 = scmp.eq.s32.totalorder %s158, 0
      %s161 = sadd.s32 %s160, 1
      %s162 = scalar_select %p159, %s160, %s161
      %p165 = pneg %p159
      %p166 = scmp.eq.s32.totalorder %s20, 6
      %p167 = por %p165, %p166
      %p168 = scmp.ne.s32.totalorder %s160, %s163
      %p169 = scmp.eq.s32.totalorder %s20, 0
      %p170 = por %p168, %p169
      %p171 = scmp.ne.s32.totalorder %s160, %s163
      %p172 = scmp.eq.s32.totalorder %s25, 6
      %p173 = por %p171, %p172
      %p174 = scmp.ne.s32.totalorder %s163, %s164
      %p175 = scmp.eq.s32.totalorder %s25, 0
      %p176 = por %p174, %p175
      %p177 = scmp.ne.s32.totalorder %s163, %s164
      %p178 = scmp.eq.s32.totalorder %s26, 6
      %p179 = por %p177, %p178
      %p181 = scmp.ne.s32.totalorder %s164, %s180
      %p182 = scmp.eq.s32.totalorder %s26, 0
      %p183 = por %p181, %p182
      %p184 = scmp.lt.s32.totalorder %s20, 5
      %s185 = scalar_select %p184, %s20, 5
      %p186 = scmp.lt.s32.totalorder %s27, 5
      %s187 = scalar_select %p186, %s27, 5
      %s188 = ssub.s32 %s185, %s187
      %p189 = scmp.eq.s32.totalorder %s188, 0
      %s191 = sadd.s32 %s190, 1
      %s192 = scalar_select %p189, %s190, %s191
      %p195 = pneg %p189
      %p196 = scmp.eq.s32.totalorder %s20, 6
      %p197 = por %p195, %p196
      %p198 = scmp.ne.s32.totalorder %s190, %s193
      %p199 = scmp.eq.s32.totalorder %s20, 0
      %p200 = por %p198, %p199
      %p201 = scmp.ne.s32.totalorder %s190, %s193
      %p202 = scmp.eq.s32.totalorder %s25, 6
      %p203 = por %p201, %p202
      %p204 = scmp.ne.s32.totalorder %s193, %s194
      %p205 = scmp.eq.s32.totalorder %s25, 0
      %p206 = por %p204, %p205
      %p207 = scmp.ne.s32.totalorder %s193, %s194
      %p208 = scmp.eq.s32.totalorder %s26, 6
      %p209 = por %p207, %p208
      %p211 = scmp.ne.s32.totalorder %s194, %s210
      %p212 = scmp.eq.s32.totalorder %s26, 0
      %p213 = por %p211, %p212
      %s214 = ssub.s32 %s20, %s27
      %p215 = scmp.eq.s32.totalorder %s214, 0
      %s217 = sadd.s32 %s216, 1
      %s218 = scalar_select %p215, %s216, %s217
      %p221 = pneg %p215
      %p222 = scmp.eq.s32.totalorder %s20, 6
      %p223 = por %p221, %p222
      %p224 = scmp.ne.s32.totalorder %s216, %s219
      %p225 = scmp.eq.s32.totalorder %s20, 0
      %p226 = por %p224, %p225
      %p227 = scmp.ne.s32.totalorder %s216, %s219
      %p228 = scmp.eq.s32.totalorder %s25, 6
      %p229 = por %p227, %p228
      %p230 = scmp.ne.s32.totalorder %s219, %s220
      %p231 = scmp.eq.s32.totalorder %s25, 0
      %p232 = por %p230, %p231
      %p233 = scmp.ne.s32.totalorder %s219, %s220
      %p234 = scmp.eq.s32.totalorder %s26, 6
      %p235 = por %p233, %p234
      %p237 = scmp.ne.s32.totalorder %s220, %s236
      %p238 = scmp.eq.s32.totalorder %s26, 0
      %p239 = por %p237, %p238
      %p240 = scmp.le.s32.totalorder 1, %s20
      %p241 = scmp.lt.s32.totalorder %s20, 8
      %p242 = pnand %p240, %p241
      %p243 = pneg %p242
      // Predicated region
      $region9: #{adaln_single_forward.1} parent=5 // pred_check
        _
      $region10: #{adaln_single_forward.1} parent=5 // pred_check_branch
        %245 = sbr.rel (%p242) target = $region12
      $region11: #{adaln_single_forward.1} parent=5 // pred_region
        %s246 = ssub.s32 %s20, 1
        // Predicated region
        $region13: #{adaln_single_forward.1} parent=11 // pred_check
          %p247 = pneg %p41
        $region14: #{adaln_single_forward.1} parent=11 // pred_check_branch
          %249 = sbr.rel (%p247) target = $region16
        $region15: #{adaln_single_forward.1} parent=11 // pred_region
          _
        $region16: #{adaln_single_forward.1} parent=11 // pred_fallthru
          _
        // Predicated region
        $region17: #{adaln_single_forward.1} parent=11 // pred_check
          %p250 = pneg %p62
        $region18: #{adaln_single_forward.1} parent=11 // pred_check_branch
          %252 = sbr.rel (%p250) target = $region20
        $region19: #{adaln_single_forward.1} parent=11 // pred_region
          %254 = vsyncadd [#allocation3], 0
          %s255 = sshll.u32 %s1, 4
          %s256 = int_to_ptr.hbm [resolvable:$true] %s255
          %s257 = sshll.u32 [#allocation2], 4
          %s258 = int_to_ptr.vmem [resolvable:$true] %s257
          %263 = dma.hbm_to_vmem [thread:$0]  %s256, 6144, %s258, [#allocation3], 384, 384, 24
        $region20: #{adaln_single_forward.1} parent=11 // pred_fallthru
          _
        // Predicated region
        $region21: #{adaln_single_forward.1} parent=11 // pred_check
          %p264 = pneg %p83
        $region22: #{adaln_single_forward.1} parent=11 // pred_check_branch
          %266 = sbr.rel (%p264) target = $region24
        $region23: #{adaln_single_forward.1} parent=11 // pred_region
          %268 = vsyncadd [#allocation5], 0
          %s269 = sshll.u32 %s2, 4
          %s270 = int_to_ptr.hbm [resolvable:$true] %s269
          %s271 = sshll.u32 [#allocation4], 4
          %s272 = int_to_ptr.vmem [resolvable:$true] %s271
          %277 = dma.hbm_to_vmem [thread:$0]  %s270, 6144, %s272, [#allocation5], 384, 384, 24
        $region24: #{adaln_single_forward.1} parent=11 // pred_fallthru
          _
        // Predicated region
        $region25: #{adaln_single_forward.1} parent=11 // pred_check
          %p278 = pneg %p104
        $region26: #{adaln_single_forward.1} parent=11 // pred_check_branch
          %280 = sbr.rel (%p278) target = $region28
        $region27: #{adaln_single_forward.1} parent=11 // pred_region
          %282 = vsyncadd [#allocation5], 0
          %s284 = sshll.u32 %s3, 4
          %s285 = int_to_ptr.hbm [resolvable:$true] %s284
          %s286 = sshll.u32 [#allocation6], 4
          %s287 = int_to_ptr.vmem [resolvable:$true] %s286
          %289 = dma.hbm_to_vmem [thread:$0]  %s285, 48, %s287, [#allocation5]
        $region28: #{adaln_single_forward.1} parent=11 // pred_fallthru
          _
        // Predicated region
        $region29: #{adaln_single_forward.1} parent=11 // pred_check
          %p290 = pneg %p125
        $region30: #{adaln_single_forward.1} parent=11 // pred_check_branch
          %292 = sbr.rel (%p290) target = $region32
        $region31: #{adaln_single_forward.1} parent=11 // pred_region
          %294 = vsyncadd [#allocation8], 0
          %s295 = sshll.u32 %s4, 4
          %s296 = int_to_ptr.hbm [resolvable:$true] %s295
          %s297 = sshll.u32 [#allocation7], 4
          %s298 = int_to_ptr.vmem [resolvable:$true] %s297
          %303 = dma.hbm_to_vmem [thread:$0]  %s296, 9216, %s298, [#allocation8], 192, 192, 12
        $region32: #{adaln_single_forward.1} parent=11 // pred_fallthru
          _
        // Predicated region
        $region33: #{adaln_single_forward.1} parent=11 // pred_check
          %p304 = pneg %p146
        $region34: #{adaln_single_forward.1} parent=11 // pred_check_branch
          %306 = sbr.rel (%p304) target = $region36
        $region35: #{adaln_single_forward.1} parent=11 // pred_region
          %308 = vsyncadd [#allocation8], 0
          %s310 = sshll.u32 %s5, 4
          %s311 = int_to_ptr.hbm [resolvable:$true] %s310
          %s312 = sshll.u32 [#allocation9], 4
          %s313 = int_to_ptr.vmem [resolvable:$true] %s312
          %315 = dma.hbm_to_vmem [thread:$0]  %s311, 48, %s313, [#allocation8]
        $region36: #{adaln_single_forward.1} parent=11 // pred_fallthru
          _
      $region12: #{adaln_single_forward.1} parent=5 // pred_fallthru
        _
      %p316 = scmp.lt.s32.totalorder %s20, 7
      // Predicated region
      $region37: #{adaln_single_forward.1} parent=5 // pred_check
        %p317 = pneg %p316
      $region38: #{adaln_single_forward.1} parent=5 // pred_check_branch
        %319 = sbr.rel (%p317) target = $region40
      $region39: #{adaln_single_forward.1} parent=5 // pred_region
        // Predicated region
        $region41: #{adaln_single_forward.1} parent=39 // pred_check
          %p320 = pneg %p170
        $region42: #{adaln_single_forward.1} parent=39 // pred_check_branch
          %322 = sbr.rel (%p320) target = $region44
        $region43: #{adaln_single_forward.1} parent=39 // pred_region
          %s323 = sand.u32 %s20, 1
          %s324 = scalar_lea.sflag [#allocation11], %s323
          %s325 = sand.u32 %s160, 1
          %s326 = smul.addr %s325, 576
          %s327 = scalar_lea.vmem [#allocation10], %s326
          %p328 = scmp.lt.s32.totalorder %s20, 5
          %s329 = scalar_select %p328, %s20, 5
          %s330 = smul.u32 3, %s329
          %332 = vsyncadd %s324, 0
          %s333 = smul.addr %s330, 4
          %s334 = scalar_lea.hbm %s6, %s333
          %s335 = sshll.u32 %s334, 4
          %s336 = int_to_ptr.hbm [resolvable:$true] %s335
          %s337 = sshll.u32 %s327, 4
          %s338 = int_to_ptr.vmem [resolvable:$true] %s337
          %343 = dma.hbm_to_vmem [thread:$0]  %s336, 9216, %s338, %s324, 1152, 192, 12
        $region44: #{adaln_single_forward.1} parent=39 // pred_fallthru
          _
        // Predicated region
        $region45: #{adaln_single_forward.1} parent=39 // pred_check
          %p344 = pneg %p200
        $region46: #{adaln_single_forward.1} parent=39 // pred_check_branch
          %346 = sbr.rel (%p344) target = $region48
        $region47: #{adaln_single_forward.1} parent=39 // pred_region
          %s347 = sand.u32 %s20, 1
          %s348 = scalar_lea.sflag [#allocation11], %s347
          %s349 = sand.u32 %s190, 1
          %s350 = smul.addr %s349, 3
          %s351 = scalar_lea.vmem [#allocation12], %s350
          %p352 = scmp.lt.s32.totalorder %s20, 5
          %s353 = scalar_select %p352, %s20, 5
          %s354 = smul.u32 3, %s353
          %356 = vsyncadd %s348, 0
          %s357 = scalar_lea.hbm %s7, %s354
          %s359 = sshll.u32 %s357, 4
          %s360 = int_to_ptr.hbm [resolvable:$true] %s359
          %s361 = sshll.u32 %s351, 4
          %s362 = int_to_ptr.vmem [resolvable:$true] %s361
          %364 = dma.hbm_to_vmem [thread:$0]  %s360, 48, %s362, %s348
        $region48: #{adaln_single_forward.1} parent=39 // pred_fallthru
          _
      $region40: #{adaln_single_forward.1} parent=5 // pred_fallthru
        _
      %p365 = scmp.le.s32.totalorder 1, %s20
      %p366 = scmp.lt.s32.totalorder %s20, 8
      %p367 = pnand %p365, %p366
      %p368 = pneg %p367
      // Predicated region
      $region49: #{adaln_single_forward.1} parent=5 // pred_check
        _
      $region50: #{adaln_single_forward.1} parent=5 // pred_check_branch
        %370 = sbr.rel (%p367) target = $region52
      $region51: #{adaln_single_forward.1} parent=5 // pred_region
        %s371 = ssub.s32 %s20, 1
        // Predicated region
        $region53: #{adaln_single_forward.1} parent=51 // pred_check
          %p372 = pneg %p62
        $region54: #{adaln_single_forward.1} parent=51 // pred_check_branch
          %374 = sbr.rel (%p372) target = $region56
        $region55: #{adaln_single_forward.1} parent=51 // pred_region
          %376 = dma.done [#allocation3], 6144
        $region56: #{adaln_single_forward.1} parent=51 // pred_fallthru
          _
        // Predicated region
        $region57: #{adaln_single_forward.1} parent=51 // pred_check
          %p377 = pneg %p83
        $region58: #{adaln_single_forward.1} parent=51 // pred_check_branch
          %379 = sbr.rel (%p377) target = $region60
        $region59: #{adaln_single_forward.1} parent=51 // pred_region
          %381 = dma.done [#allocation5], 6144
        $region60: #{adaln_single_forward.1} parent=51 // pred_fallthru
          _
        // Predicated region
        $region61: #{adaln_single_forward.1} parent=51 // pred_check
          %p382 = pneg %p104
        $region62: #{adaln_single_forward.1} parent=51 // pred_check_branch
          %384 = sbr.rel (%p382) target = $region64
        $region63: #{adaln_single_forward.1} parent=51 // pred_region
          %386 = dma.done [#allocation5], 48
        $region64: #{adaln_single_forward.1} parent=51 // pred_fallthru
          _
        // Predicated region
        $region65: #{adaln_single_forward.1} parent=51 // pred_check
          %p387 = pneg %p125
        $region66: #{adaln_single_forward.1} parent=51 // pred_check_branch
          %389 = sbr.rel (%p387) target = $region68
        $region67: #{adaln_single_forward.1} parent=51 // pred_region
          %391 = dma.done [#allocation8], 9216
        $region68: #{adaln_single_forward.1} parent=51 // pred_fallthru
          _
        // Predicated region
        $region69: #{adaln_single_forward.1} parent=51 // pred_check
          %p392 = pneg %p146
        $region70: #{adaln_single_forward.1} parent=51 // pred_check_branch
          %394 = sbr.rel (%p392) target = $region72
        $region71: #{adaln_single_forward.1} parent=51 // pred_region
          %396 = dma.done [#allocation8], 48
        $region72: #{adaln_single_forward.1} parent=51 // pred_fallthru
          _
        %s397 = sand.u32 %s25, 1
        %s398 = scalar_lea.sflag [#allocation11], %s397
        %s399 = sand.u32 %s163, 1
        %s400 = smul.addr %s399, 576
        %s401 = scalar_lea.vmem [#allocation10], %s400
        // Predicated region
        $region73: #{adaln_single_forward.1} parent=51 // pred_check
          %p402 = pneg %p176
        $region74: #{adaln_single_forward.1} parent=51 // pred_check_branch
          %404 = sbr.rel (%p402) target = $region76
        $region75: #{adaln_single_forward.1} parent=51 // pred_region
          %406 = dma.done %s398, 9216
        $region76: #{adaln_single_forward.1} parent=51 // pred_fallthru
          _
        %s407 = sand.u32 %s25, 1
        %s408 = scalar_lea.sflag [#allocation11], %s407
        %s409 = sand.u32 %s193, 1
        %s410 = smul.addr %s409, 3
        %s411 = scalar_lea.vmem [#allocation12], %s410
        // Predicated region
        $region77: #{adaln_single_forward.1} parent=51 // pred_check
          %p412 = pneg %p206
        $region78: #{adaln_single_forward.1} parent=51 // pred_check_branch
          %414 = sbr.rel (%p412) target = $region80
        $region79: #{adaln_single_forward.1} parent=51 // pred_region
          %416 = dma.done %s408, 48
        $region80: #{adaln_single_forward.1} parent=51 // pred_fallthru
          _
        %p417 = pneg %p41
        %p418 = pneg %p38
        %p419 = pneg %p62
        %p420 = pneg %p59
        %p421 = pneg %p83
        %p422 = pneg %p80
        %p423 = pneg %p104
        %p424 = pneg %p101
        %p425 = pneg %p125
        %p426 = pneg %p122
        %p427 = pneg %p146
        %p428 = pneg %p143
        %s429 = sand.u32 %s25, 1
        %s430 = scalar_lea.sflag [#allocation11], %s429
        %s431 = sand.u32 %s163, 1
        %s432 = smul.addr %s431, 576
        %s433 = scalar_lea.vmem [#allocation10], %s432
        %p434 = pneg %p176
        %p435 = pneg %p173
        %s436 = sand.u32 %s25, 1
        %s437 = scalar_lea.sflag [#allocation11], %s436
        %s438 = sand.u32 %s193, 1
        %s439 = smul.addr %s438, 3
        %s440 = scalar_lea.vmem [#allocation12], %s439
        %p441 = pneg %p206
        %p442 = pneg %p203
        %p443 = pneg %p232
        %p444 = pneg %p229
        %s445 = sand.u32 %s219, 1
        %s446 = sand.u32 %s219, 1
        %s447 = smul.addr %s446, 48
        %s448 = scalar_lea.vmem [#allocation13], %s447
        %p449 = scmp.lt.s32.totalorder %s25, 5
        %s450 = scalar_select %p449, %s25, 5
        %s451 = smul.u32 3, %s450
        %p452 = scmp.lt.s32.totalorder %s25, 5
        %s453 = scalar_select %p452, %s25, 5
        %s454 = smul.u32 3, %s453
        %s455 = smul.u32 3, %s25
        %v456 = vlaneseq
        %v457 = vand.u32 %v456, 127
        %v458 = vcvt.s32.f32 %v457
        %v459 = vmul.f32 %v458, -0.071955785
        %v460 = vmul.f32 %v459, 1.442695
        %v461 = vpow.pop %v460
        %v462 = vld [vmem:[%s0] sm:$0xff]
        %v463 = vld [vmem:[%s0 + $0x8] sm:$0xff]
        %465 = vset.pattern.permute.xlu0 0
        %466 = vperm.xlu0 %465, %v462
        %v467 = vpop.permute.xlu0 %466
        %470 = vset.pattern.permute.xlu0 0
        %471 = vperm.xlu0 %470, %v463
        %v472 = vpop.permute.xlu0 %471
        %v474 = vmul.f32 %v467, %v461
        %v475 = vmul.f32 %v472, %v461
        %v476 = vand.u32 2147483647, %v474
        %vm477 = vcmp.le.f32.partialorder %v476, 0.7853982
        %vm478 = vcmp.lt.s32.totalorder %v474, 0
        %v479 = vand.u32 %v474, 2139095040
        %v480 = vshrl.u32 %v479, 23
        %v481 = vsub.s32 %v480, 127
        %v482 = vand.u32 2147483647, %v474
        %v483 = vand.u32 %v482, 8388607
        %v484 = vor.u32 %v483, 8388608
        %v485 = vsub.s32 0, %v484
        %v486 = vadd.s32 %v481, 1
        %vm487 = vcmp.gt.s32.totalorder %v486, 0
        %v488 = vsel %vm487, %v486, 0
        %v489 = vshrl.u32 %v488, 5
        %v490 = vand.u32 %v488, 31
        %v491 = vsub.s32 32, %v490
        %v492 = vshrl.u32 683565275, %v491
        %v493 = vshll.u32 683565275, %v490
        %v494 = vshrl.u32 2475754826, %v491
        %v495 = vor.u32 %v493, %v494
        %v496 = vshll.u32 2475754826, %v490
        %v497 = vshrl.u32 2131351028, %v491
        %v498 = vor.u32 %v496, %v497
        %v499 = vshll.u32 2131351028, %v490
        %v500 = vshrl.u32 2102212464, %v491
        %v501 = vor.u32 %v499, %v500
        %v502 = vshll.u32 2102212464, %v490
        %v503 = vshrl.u32 920167782, %v491
        %v504 = vor.u32 %v502, %v503
        %v505 = vshll.u32 920167782, %v490
        %v506 = vshrl.u32 1326507024, %v491
        %v507 = vor.u32 %v505, %v506
        %vm508 = vcmp.lt.s32.totalorder %v489, 1
        %vm509 = vcmp.lt.s32.totalorder %v489, 2
        %vm510 = vcmp.lt.s32.totalorder %v489, 3
        %vm511 = vcmp.lt.s32.totalorder %v489, 4
        %v512 = vsel %vm508, %v492, %v495
        %v513 = vsel %vm511, %v501, 2102212464
        %v514 = vsel %vm510, %v498, %v513
        %v515 = vsel %vm509, %v512, %v514
        %v516 = vsel %vm508, %v495, %v498
        %v517 = vsel %vm511, %v504, 920167782
        %v518 = vsel %vm510, %v501, %v517
        %v519 = vsel %vm509, %v516, %v518
        %v520 = vsel %vm508, %v498, %v501
        %v521 = vsel %vm511, %v507, 1326507024
        %v522 = vsel %vm510, %v504, %v521
        %v523 = vsel %vm509, %v520, %v522
        %v524 = vshll.u32 %v484, 8
        %v525 = vand.u32 %v524, 65535
        %v526 = vshrl.u32 %v524, 16
        %v527 = vand.u32 %v523, 65535
        %v528 = vshrl.u32 %v523, 16
        %v529 = vmul.u32 %v525, %v527
        %v530 = vmul.u32 %v525, %v528
        %v531 = vmul.u32 %v526, %v527
        %v532 = vmul.u32 %v526, %v528
        %v533 = vshll.u32 %v530, 16
        %v534 = vshrl.u32 %v530, 16
        %v535 = vshll.u32 %v531, 16
        %v536 = vshrl.u32 %v531, 16
        %vm537 = vc.u32 %v529, %v533
        %v538 = vsel %vm537, 1, 0
        %v539 = vadd.s32 %v529, %v533
        %v540 = vadd.s32 %v532, %v538
        %vm541 = vc.u32 %v539, %v535
        %v542 = vsel %vm541, 1, 0
        %v543 = vadd.s32 %v539, %v535
        %v544 = vadd.s32 %v540, %v542
        %v545 = vadd.s32 %v544, %v534
        %v546 = vadd.s32 %v545, %v536
        %v547 = vand.u32 %v524, 65535
        %v548 = vshrl.u32 %v524, 16
        %v549 = vand.u32 %v519, 65535
        %v550 = vshrl.u32 %v519, 16
        %v551 = vmul.u32 %v547, %v549
        %v552 = vmul.u32 %v547, %v550
        %v553 = vmul.u32 %v548, %v549
        %v554 = vmul.u32 %v548, %v550
        %v555 = vshll.u32 %v552, 16
        %v556 = vshrl.u32 %v552, 16
        %v557 = vshll.u32 %v553, 16
        %v558 = vshrl.u32 %v553, 16
        %vm559 = vc.u32 %v551, %v555
        %v560 = vsel %vm559, 1, 0
        %v561 = vadd.s32 %v551, %v555
        %v562 = vadd.s32 %v554, %v560
        %vm563 = vc.u32 %v561, %v557
        %v564 = vsel %vm563, 1, 0
        %v565 = vadd.s32 %v561, %v557
        %v566 = vadd.s32 %v562, %v564
        %v567 = vadd.s32 %v566, %v556
        %v568 = vadd.s32 %v567, %v558
        %v569 = vmul.u32 %v524, %v515
        %v570 = vadd.s32 %v546, %v565
        %vm571 = vc.u32 %v546, %v565
        %v572 = vadd.s32 %v568, 1
        %v573 = vsel %vm571, %v572, %v568
        %v574 = vadd.s32 %v569, %v573
        %v575 = vadd.s32 %v574, 536870912
        %v576 = vshrl.u32 %v575, 30
        %v577 = vshll.u32 %v576, 30
        %v578 = vsub.s32 %v574, %v577
        %vm579 = vcmp.lt.s32.totalorder %v578, 0
        %v580 = vsub.s32 0, %v578
        %v581 = vsel %vm579, %v580, %v578
        %v582 = vclz %v581
        %v583 = vsub.s32 %v582, 2
        %vm584 = vcmp.gt.s32.totalorder 0, %v583
        %v585 = vsel %vm584, 0, %v583
        %v586 = vsub.s32 32, %v585
        %v587 = vshll.u32 %v578, %v585
        %v588 = vshrl.u32 %v570, %v586
        %v589 = vor.u32 %v587, %v588
        %v590 = vsub.s32 4294967266, %v585
        %v591 = vadd.s32 %v590, 127
        %v592 = vshll.u32 %v591, 23
        %v593 = vor.u32 4788187, %v592
        %v594 = vand.u32 2147483647, %v593
        %v596 = vcvt.s32.f32 %v589
        %v597 = vmul.f32 %v596, %v594
        %v598 = vxor.u32 %v597, 2147483648
        %v599 = vsel %vm478, %v598, %v597
        %v600 = vsub.s32 4, %v576
        %v601 = vsel %vm478, %v600, %v576
        %v602 = vsel %vm477, %v474, %v599
        %v603 = vsel %vm477, 0, %v601
        %v604 = vmul.f32 %v602, %v602
        %v605 = vmul.f32 %v604, -0.001358992
        %v606 = vadd.f32 %v605, 0.041655596
        %v607 = vmul.f32 %v604, %v606
        %v608 = vadd.f32 %v607, -0.4999988
        %v609 = vmul.f32 %v604, %v608
        %v610 = vadd.f32 1.0, %v609
        %v611 = vmul.f32 %v602, %v602
        %v612 = vmul.f32 %v611, -0.00019511016
        %v613 = vadd.f32 %v612, 0.008332121
        %v614 = vmul.f32 %v611, %v613
        %v615 = vadd.f32 %v614, -0.16666654
        %v616 = vmul.f32 %v611, %v615
        %v617 = vadd.f32 %v616, 1.0
        %v618 = vmul.f32 %v617, %v602
        %vm619 = vweird.f32 %v474
        %v620 = vand.u32 %v603, 3
        %vm621 = vcmp.lt.s32.totalorder %v620, 2
        %vm622 = vcmp.eq.s32.totalorder %v620, 0
        %v623 = vxor.u32 %v618, 2147483648
        %v624 = vsel %vm622, %v610, %v623
        %vm625 = vcmp.eq.s32.totalorder %v620, 2
        %v626 = vxor.u32 %v610, 2147483648
        %v627 = vsel %vm625, %v626, %v618
        %v628 = vsel %vm621, %v624, %v627
        %v629 = vsel %vm619, nan, %v628
        %v630 = vand.u32 2147483647, %v475
        %vm631 = vcmp.le.f32.partialorder %v630, 0.7853982
        %vm632 = vcmp.lt.s32.totalorder %v475, 0
        %v633 = vand.u32 %v475, 2139095040
        %v634 = vshrl.u32 %v633, 23
        %v635 = vsub.s32 %v634, 127
        %v636 = vand.u32 2147483647, %v475
        %v637 = vand.u32 %v636, 8388607
        %v638 = vor.u32 %v637, 8388608
        %v639 = vsub.s32 0, %v638
        %v640 = vadd.s32 %v635, 1
        %vm641 = vcmp.gt.s32.totalorder %v640, 0
        %v642 = vsel %vm641, %v640, 0
        %v643 = vshrl.u32 %v642, 5
        %v644 = vand.u32 %v642, 31
        %v645 = vsub.s32 32, %v644
        %v646 = vshrl.u32 683565275, %v645
        %v647 = vshll.u32 683565275, %v644
        %v648 = vshrl.u32 2475754826, %v645
        %v649 = vor.u32 %v647, %v648
        %v650 = vshll.u32 2475754826, %v644
        %v651 = vshrl.u32 2131351028, %v645
        %v652 = vor.u32 %v650, %v651
        %v653 = vshll.u32 2131351028, %v644
        %v654 = vshrl.u32 2102212464, %v645
        %v655 = vor.u32 %v653, %v654
        %v656 = vshll.u32 2102212464, %v644
        %v657 = vshrl.u32 920167782, %v645
        %v658 = vor.u32 %v656, %v657
        %v659 = vshll.u32 920167782, %v644
        %v660 = vshrl.u32 1326507024, %v645
        %v661 = vor.u32 %v659, %v660
        %vm662 = vcmp.lt.s32.totalorder %v643, 1
        %vm663 = vcmp.lt.s32.totalorder %v643, 2
        %vm664 = vcmp.lt.s32.totalorder %v643, 3
        %vm665 = vcmp.lt.s32.totalorder %v643, 4
        %v666 = vsel %vm662, %v646, %v649
        %v667 = vsel %vm665, %v655, 2102212464
        %v668 = vsel %vm664, %v652, %v667
        %v669 = vsel %vm663, %v666, %v668
        %v670 = vsel %vm662, %v649, %v652
        %v671 = vsel %vm665, %v658, 920167782
        %v672 = vsel %vm664, %v655, %v671
        %v673 = vsel %vm663, %v670, %v672
        %v674 = vsel %vm662, %v652, %v655
        %v675 = vsel %vm665, %v661, 1326507024
        %v676 = vsel %vm664, %v658, %v675
        %v677 = vsel %vm663, %v674, %v676
        %v678 = vshll.u32 %v638, 8
        %v679 = vand.u32 %v678, 65535
        %v680 = vshrl.u32 %v678, 16
        %v681 = vand.u32 %v677, 65535
        %v682 = vshrl.u32 %v677, 16
        %v683 = vmul.u32 %v679, %v681
        %v684 = vmul.u32 %v679, %v682
        %v685 = vmul.u32 %v680, %v681
        %v686 = vmul.u32 %v680, %v682
        %v687 = vshll.u32 %v684, 16
        %v688 = vshrl.u32 %v684, 16
        %v689 = vshll.u32 %v685, 16
        %v690 = vshrl.u32 %v685, 16
        %vm691 = vc.u32 %v683, %v687
        %v692 = vsel %vm691, 1, 0
        %v693 = vadd.s32 %v683, %v687
        %v694 = vadd.s32 %v686, %v692
        %vm695 = vc.u32 %v693, %v689
        %v696 = vsel %vm695, 1, 0
        %v697 = vadd.s32 %v693, %v689
        %v698 = vadd.s32 %v694, %v696
        %v699 = vadd.s32 %v698, %v688
        %v700 = vadd.s32 %v699, %v690
        %v701 = vand.u32 %v678, 65535
        %v702 = vshrl.u32 %v678, 16
        %v703 = vand.u32 %v673, 65535
        %v704 = vshrl.u32 %v673, 16
        %v705 = vmul.u32 %v701, %v703
        %v706 = vmul.u32 %v701, %v704
        %v707 = vmul.u32 %v702, %v703
        %v708 = vmul.u32 %v702, %v704
        %v709 = vshll.u32 %v706, 16
        %v710 = vshrl.u32 %v706, 16
        %v711 = vshll.u32 %v707, 16
        %v712 = vshrl.u32 %v707, 16
        %vm713 = vc.u32 %v705, %v709
        %v714 = vsel %vm713, 1, 0
        %v715 = vadd.s32 %v705, %v709
        %v716 = vadd.s32 %v708, %v714
        %vm717 = vc.u32 %v715, %v711
        %v718 = vsel %vm717, 1, 0
        %v719 = vadd.s32 %v715, %v711
        %v720 = vadd.s32 %v716, %v718
        %v721 = vadd.s32 %v720, %v710
        %v722 = vadd.s32 %v721, %v712
        %v723 = vmul.u32 %v678, %v669
        %v724 = vadd.s32 %v700, %v719
        %vm725 = vc.u32 %v700, %v719
        %v726 = vadd.s32 %v722, 1
        %v727 = vsel %vm725, %v726, %v722
        %v728 = vadd.s32 %v723, %v727
        %v729 = vadd.s32 %v728, 536870912
        %v730 = vshrl.u32 %v729, 30
        %v731 = vshll.u32 %v730, 30
        %v732 = vsub.s32 %v728, %v731
        %vm733 = vcmp.lt.s32.totalorder %v732, 0
        %v734 = vsub.s32 0, %v732
        %v735 = vsel %vm733, %v734, %v732
        %v736 = vclz %v735
        %v737 = vsub.s32 %v736, 2
        %vm738 = vcmp.gt.s32.totalorder 0, %v737
        %v739 = vsel %vm738, 0, %v737
        %v740 = vsub.s32 32, %v739
        %v741 = vshll.u32 %v732, %v739
        %v742 = vshrl.u32 %v724, %v740
        %v743 = vor.u32 %v741, %v742
        %v744 = vsub.s32 4294967266, %v739
        %v745 = vadd.s32 %v744, 127
        %v746 = vshll.u32 %v745, 23
        %v747 = vor.u32 4788187, %v746
        %v748 = vand.u32 2147483647, %v747
        %v750 = vcvt.s32.f32 %v743
        %v751 = vmul.f32 %v750, %v748
        %v752 = vxor.u32 %v751, 2147483648
        %v753 = vsel %vm632, %v752, %v751
        %v754 = vsub.s32 4, %v730
        %v755 = vsel %vm632, %v754, %v730
        %v756 = vsel %vm631, %v475, %v753
        %v757 = vsel %vm631, 0, %v755
        %v758 = vmul.f32 %v756, %v756
        %v759 = vmul.f32 %v758, -0.001358992
        %v760 = vadd.f32 %v759, 0.041655596
        %v761 = vmul.f32 %v758, %v760
        %v762 = vadd.f32 %v761, -0.4999988
        %v763 = vmul.f32 %v758, %v762
        %v764 = vadd.f32 1.0, %v763
        %v765 = vmul.f32 %v756, %v756
        %v766 = vmul.f32 %v765, -0.00019511016
        %v767 = vadd.f32 %v766, 0.008332121
        %v768 = vmul.f32 %v765, %v767
        %v769 = vadd.f32 %v768, -0.16666654
        %v770 = vmul.f32 %v765, %v769
        %v771 = vadd.f32 %v770, 1.0
        %v772 = vmul.f32 %v771, %v756
        %vm773 = vweird.f32 %v475
        %v774 = vand.u32 %v757, 3
        %vm775 = vcmp.lt.s32.totalorder %v774, 2
        %vm776 = vcmp.eq.s32.totalorder %v774, 0
        %v777 = vxor.u32 %v772, 2147483648
        %v778 = vsel %vm776, %v764, %v777
        %vm779 = vcmp.eq.s32.totalorder %v774, 2
        %v780 = vxor.u32 %v764, 2147483648
        %v781 = vsel %vm779, %v780, %v772
        %v782 = vsel %vm775, %v778, %v781
        %v783 = vsel %vm773, nan, %v782
        %v784 = vand.u32 2147483647, %v474
        %vm785 = vcmp.le.f32.partialorder %v784, 0.7853982
        %vm786 = vcmp.lt.s32.totalorder %v474, 0
        %v787 = vand.u32 %v474, 2139095040
        %v788 = vshrl.u32 %v787, 23
        %v789 = vsub.s32 %v788, 127
        %v790 = vand.u32 2147483647, %v474
        %v791 = vand.u32 %v790, 8388607
        %v792 = vor.u32 %v791, 8388608
        %v793 = vsub.s32 0, %v792
        %v794 = vadd.s32 %v789, 1
        %vm795 = vcmp.gt.s32.totalorder %v794, 0
        %v796 = vsel %vm795, %v794, 0
        %v797 = vshrl.u32 %v796, 5
        %v798 = vand.u32 %v796, 31
        %v799 = vsub.s32 32, %v798
        %v800 = vshrl.u32 683565275, %v799
        %v801 = vshll.u32 683565275, %v798
        %v802 = vshrl.u32 2475754826, %v799
        %v803 = vor.u32 %v801, %v802
        %v804 = vshll.u32 2475754826, %v798
        %v805 = vshrl.u32 2131351028, %v799
        %v806 = vor.u32 %v804, %v805
        %v807 = vshll.u32 2131351028, %v798
        %v808 = vshrl.u32 2102212464, %v799
        %v809 = vor.u32 %v807, %v808
        %v810 = vshll.u32 2102212464, %v798
        %v811 = vshrl.u32 920167782, %v799
        %v812 = vor.u32 %v810, %v811
        %v813 = vshll.u32 920167782, %v798
        %v814 = vshrl.u32 1326507024, %v799
        %v815 = vor.u32 %v813, %v814
        %vm816 = vcmp.lt.s32.totalorder %v797, 1
        %vm817 = vcmp.lt.s32.totalorder %v797, 2
        %vm818 = vcmp.lt.s32.totalorder %v797, 3
        %vm819 = vcmp.lt.s32.totalorder %v797, 4
        %v820 = vsel %vm816, %v800, %v803
        %v821 = vsel %vm819, %v809, 2102212464
        %v822 = vsel %vm818, %v806, %v821
        %v823 = vsel %vm817, %v820, %v822
        %v824 = vsel %vm816, %v803, %v806
        %v825 = vsel %vm819, %v812, 920167782
        %v826 = vsel %vm818, %v809, %v825
        %v827 = vsel %vm817, %v824, %v826
        %v828 = vsel %vm816, %v806, %v809
        %v829 = vsel %vm819, %v815, 1326507024
        %v830 = vsel %vm818, %v812, %v829
        %v831 = vsel %vm817, %v828, %v830
        %v832 = vshll.u32 %v792, 8
        %v833 = vand.u32 %v832, 65535
        %v834 = vshrl.u32 %v832, 16
        %v835 = vand.u32 %v831, 65535
        %v836 = vshrl.u32 %v831, 16
        %v837 = vmul.u32 %v833, %v835
        %v838 = vmul.u32 %v833, %v836
        %v839 = vmul.u32 %v834, %v835
        %v840 = vmul.u32 %v834, %v836
        %v841 = vshll.u32 %v838, 16
        %v842 = vshrl.u32 %v838, 16
        %v843 = vshll.u32 %v839, 16
        %v844 = vshrl.u32 %v839, 16
        %vm845 = vc.u32 %v837, %v841
        %v846 = vsel %vm845, 1, 0
        %v847 = vadd.s32 %v837, %v841
        %v848 = vadd.s32 %v840, %v846
        %vm849 = vc.u32 %v847, %v843
        %v850 = vsel %vm849, 1, 0
        %v851 = vadd.s32 %v847, %v843
        %v852 = vadd.s32 %v848, %v850
        %v853 = vadd.s32 %v852, %v842
        %v854 = vadd.s32 %v853, %v844
        %v855 = vand.u32 %v832, 65535
        %v856 = vshrl.u32 %v832, 16
        %v857 = vand.u32 %v827, 65535
        %v858 = vshrl.u32 %v827, 16
        %v859 = vmul.u32 %v855, %v857
        %v860 = vmul.u32 %v855, %v858
        %v861 = vmul.u32 %v856, %v857
        %v862 = vmul.u32 %v856, %v858
        %v863 = vshll.u32 %v860, 16
        %v864 = vshrl.u32 %v860, 16
        %v865 = vshll.u32 %v861, 16
        %v866 = vshrl.u32 %v861, 16
        %vm867 = vc.u32 %v859, %v863
        %v868 = vsel %vm867, 1, 0
        %v869 = vadd.s32 %v859, %v863
        %v870 = vadd.s32 %v862, %v868
        %vm871 = vc.u32 %v869, %v865
        %v872 = vsel %vm871, 1, 0
        %v873 = vadd.s32 %v869, %v865
        %v874 = vadd.s32 %v870, %v872
        %v875 = vadd.s32 %v874, %v864
        %v876 = vadd.s32 %v875, %v866
        %v877 = vmul.u32 %v832, %v823
        %v878 = vadd.s32 %v854, %v873
        %vm879 = vc.u32 %v854, %v873
        %v880 = vadd.s32 %v876, 1
        %v881 = vsel %vm879, %v880, %v876
        %v882 = vadd.s32 %v877, %v881
        %v883 = vadd.s32 %v882, 536870912
        %v884 = vshrl.u32 %v883, 30
        %v885 = vshll.u32 %v884, 30
        %v886 = vsub.s32 %v882, %v885
        %vm887 = vcmp.lt.s32.totalorder %v886, 0
        %v888 = vsub.s32 0, %v886
        %v889 = vsel %vm887, %v888, %v886
        %v890 = vclz %v889
        %v891 = vsub.s32 %v890, 2
        %vm892 = vcmp.gt.s32.totalorder 0, %v891
        %v893 = vsel %vm892, 0, %v891
        %v894 = vsub.s32 32, %v893
        %v895 = vshll.u32 %v886, %v893
        %v896 = vshrl.u32 %v878, %v894
        %v897 = vor.u32 %v895, %v896
        %v898 = vsub.s32 4294967266, %v893
        %v899 = vadd.s32 %v898, 127
        %v900 = vshll.u32 %v899, 23
        %v901 = vor.u32 4788187, %v900
        %v902 = vand.u32 2147483647, %v901
        %v904 = vcvt.s32.f32 %v897
        %v905 = vmul.f32 %v904, %v902
        %v906 = vxor.u32 %v905, 2147483648
        %v907 = vsel %vm786, %v906, %v905
        %v908 = vsub.s32 4, %v884
        %v909 = vsel %vm786, %v908, %v884
        %v910 = vsel %vm785, %v474, %v907
        %v911 = vsel %vm785, 0, %v909
        %v912 = vmul.f32 %v910, %v910
        %v913 = vmul.f32 %v912, -0.001358992
        %v914 = vadd.f32 %v913, 0.041655596
        %v915 = vmul.f32 %v912, %v914
        %v916 = vadd.f32 %v915, -0.4999988
        %v917 = vmul.f32 %v912, %v916
        %v918 = vadd.f32 1.0, %v917
        %v919 = vmul.f32 %v910, %v910
        %v920 = vmul.f32 %v919, -0.00019511016
        %v921 = vadd.f32 %v920, 0.008332121
        %v922 = vmul.f32 %v919, %v921
        %v923 = vadd.f32 %v922, -0.16666654
        %v924 = vmul.f32 %v919, %v923
        %v925 = vadd.f32 %v924, 1.0
        %v926 = vmul.f32 %v925, %v910
        %vm927 = vweird.f32 %v474
        %v928 = vadd.s32 %v911, 3
        %v929 = vand.u32 %v928, 3
        %vm930 = vcmp.lt.s32.totalorder %v929, 2
        %vm931 = vcmp.eq.s32.totalorder %v929, 0
        %v932 = vxor.u32 %v926, 2147483648
        %v933 = vsel %vm931, %v918, %v932
        %vm934 = vcmp.eq.s32.totalorder %v929, 2
        %v935 = vxor.u32 %v918, 2147483648
        %v936 = vsel %vm934, %v935, %v926
        %v937 = vsel %vm930, %v933, %v936
        %v938 = vsel %vm927, nan, %v937
        %v939 = vand.u32 2147483647, %v475
        %vm940 = vcmp.le.f32.partialorder %v939, 0.7853982
        %vm941 = vcmp.lt.s32.totalorder %v475, 0
        %v942 = vand.u32 %v475, 2139095040
        %v943 = vshrl.u32 %v942, 23
        %v944 = vsub.s32 %v943, 127
        %v945 = vand.u32 2147483647, %v475
        %v946 = vand.u32 %v945, 8388607
        %v947 = vor.u32 %v946, 8388608
        %v948 = vsub.s32 0, %v947
        %v949 = vadd.s32 %v944, 1
        %vm950 = vcmp.gt.s32.totalorder %v949, 0
        %v951 = vsel %vm950, %v949, 0
        %v952 = vshrl.u32 %v951, 5
        %v953 = vand.u32 %v951, 31
        %v954 = vsub.s32 32, %v953
        %v955 = vshrl.u32 683565275, %v954
        %v956 = vshll.u32 683565275, %v953
        %v957 = vshrl.u32 2475754826, %v954
        %v958 = vor.u32 %v956, %v957
        %v959 = vshll.u32 2475754826, %v953
        %v960 = vshrl.u32 2131351028, %v954
        %v961 = vor.u32 %v959, %v960
        %v962 = vshll.u32 2131351028, %v953
        %v963 = vshrl.u32 2102212464, %v954
        %v964 = vor.u32 %v962, %v963
        %v965 = vshll.u32 2102212464, %v953
        %v966 = vshrl.u32 920167782, %v954
        %v967 = vor.u32 %v965, %v966
        %v968 = vshll.u32 920167782, %v953
        %v969 = vshrl.u32 1326507024, %v954
        %v970 = vor.u32 %v968, %v969
        %vm971 = vcmp.lt.s32.totalorder %v952, 1
        %vm972 = vcmp.lt.s32.totalorder %v952, 2
        %vm973 = vcmp.lt.s32.totalorder %v952, 3
        %vm974 = vcmp.lt.s32.totalorder %v952, 4
        %v975 = vsel %vm971, %v955, %v958
        %v976 = vsel %vm974, %v964, 2102212464
        %v977 = vsel %vm973, %v961, %v976
        %v978 = vsel %vm972, %v975, %v977
        %v979 = vsel %vm971, %v958, %v961
        %v980 = vsel %vm974, %v967, 920167782
        %v981 = vsel %vm973, %v964, %v980
        %v982 = vsel %vm972, %v979, %v981
        %v983 = vsel %vm971, %v961, %v964
        %v984 = vsel %vm974, %v970, 1326507024
        %v985 = vsel %vm973, %v967, %v984
        %v986 = vsel %vm972, %v983, %v985
        %v987 = vshll.u32 %v947, 8
        %v988 = vand.u32 %v987, 65535
        %v989 = vshrl.u32 %v987, 16
        %v990 = vand.u32 %v986, 65535
        %v991 = vshrl.u32 %v986, 16
        %v992 = vmul.u32 %v988, %v990
        %v993 = vmul.u32 %v988, %v991
        %v994 = vmul.u32 %v989, %v990
        %v995 = vmul.u32 %v989, %v991
        %v996 = vshll.u32 %v993, 16
        %v997 = vshrl.u32 %v993, 16
        %v998 = vshll.u32 %v994, 16
        %v999 = vshrl.u32 %v994, 16
        %vm1000 = vc.u32 %v992, %v996
        %v1001 = vsel %vm1000, 1, 0
        %v1002 = vadd.s32 %v992, %v996
        %v1003 = vadd.s32 %v995, %v1001
        %vm1004 = vc.u32 %v1002, %v998
        %v1005 = vsel %vm1004, 1, 0
        %v1006 = vadd.s32 %v1002, %v998
        %v1007 = vadd.s32 %v1003, %v1005
        %v1008 = vadd.s32 %v1007, %v997
        %v1009 = vadd.s32 %v1008, %v999
        %v1010 = vand.u32 %v987, 65535
        %v1011 = vshrl.u32 %v987, 16
        %v1012 = vand.u32 %v982, 65535
        %v1013 = vshrl.u32 %v982, 16
        %v1014 = vmul.u32 %v1010, %v1012
        %v1015 = vmul.u32 %v1010, %v1013
        %v1016 = vmul.u32 %v1011, %v1012
        %v1017 = vmul.u32 %v1011, %v1013
        %v1018 = vshll.u32 %v1015, 16
        %v1019 = vshrl.u32 %v1015, 16
        %v1020 = vshll.u32 %v1016, 16
        %v1021 = vshrl.u32 %v1016, 16
        %vm1022 = vc.u32 %v1014, %v1018
        %v1023 = vsel %vm1022, 1, 0
        %v1024 = vadd.s32 %v1014, %v1018
        %v1025 = vadd.s32 %v1017, %v1023
        %vm1026 = vc.u32 %v1024, %v1020
        %v1027 = vsel %vm1026, 1, 0
        %v1028 = vadd.s32 %v1024, %v1020
        %v1029 = vadd.s32 %v1025, %v1027
        %v1030 = vadd.s32 %v1029, %v1019
        %v1031 = vadd.s32 %v1030, %v1021
        %v1032 = vmul.u32 %v987, %v978
        %v1033 = vadd.s32 %v1009, %v1028
        %vm1034 = vc.u32 %v1009, %v1028
        %v1035 = vadd.s32 %v1031, 1
        %v1036 = vsel %vm1034, %v1035, %v1031
        %v1037 = vadd.s32 %v1032, %v1036
        %v1038 = vadd.s32 %v1037, 536870912
        %v1039 = vshrl.u32 %v1038, 30
        %v1040 = vshll.u32 %v1039, 30
        %v1041 = vsub.s32 %v1037, %v1040
        %vm1042 = vcmp.lt.s32.totalorder %v1041, 0
        %v1043 = vsub.s32 0, %v1041
        %v1044 = vsel %vm1042, %v1043, %v1041
        %v1045 = vclz %v1044
        %v1046 = vsub.s32 %v1045, 2
        %vm1047 = vcmp.gt.s32.totalorder 0, %v1046
        %v1048 = vsel %vm1047, 0, %v1046
        %v1049 = vsub.s32 32, %v1048
        %v1050 = vshll.u32 %v1041, %v1048
        %v1051 = vshrl.u32 %v1033, %v1049
        %v1052 = vor.u32 %v1050, %v1051
        %v1053 = vsub.s32 4294967266, %v1048
        %v1054 = vadd.s32 %v1053, 127
        %v1055 = vshll.u32 %v1054, 23
        %v1056 = vor.u32 4788187, %v1055
        %v1057 = vand.u32 2147483647, %v1056
        %v1059 = vcvt.s32.f32 %v1052
        %v1060 = vmul.f32 %v1059, %v1057
        %v1061 = vxor.u32 %v1060, 2147483648
        %v1062 = vsel %vm941, %v1061, %v1060
        %v1063 = vsub.s32 4, %v1039
        %v1064 = vsel %vm941, %v1063, %v1039
        %v1065 = vsel %vm940, %v475, %v1062
        %v1066 = vsel %vm940, 0, %v1064
        %v1067 = vmul.f32 %v1065, %v1065
        %v1068 = vmul.f32 %v1067, -0.001358992
        %v1069 = vadd.f32 %v1068, 0.041655596
        %v1070 = vmul.f32 %v1067, %v1069
        %v1071 = vadd.f32 %v1070, -0.4999988
        %v1072 = vmul.f32 %v1067, %v1071
        %v1073 = vadd.f32 1.0, %v1072
        %v1074 = vmul.f32 %v1065, %v1065
        %v1075 = vmul.f32 %v1074, -0.00019511016
        %v1076 = vadd.f32 %v1075, 0.008332121
        %v1077 = vmul.f32 %v1074, %v1076
        %v1078 = vadd.f32 %v1077, -0.16666654
        %v1079 = vmul.f32 %v1074, %v1078
        %v1080 = vadd.f32 %v1079, 1.0
        %v1081 = vmul.f32 %v1080, %v1065
        %vm1082 = vweird.f32 %v475
        %v1083 = vadd.s32 %v1066, 3
        %v1084 = vand.u32 %v1083, 3
        %vm1085 = vcmp.lt.s32.totalorder %v1084, 2
        %vm1086 = vcmp.eq.s32.totalorder %v1084, 0
        %v1087 = vxor.u32 %v1081, 2147483648
        %v1088 = vsel %vm1086, %v1073, %v1087
        %vm1089 = vcmp.eq.s32.totalorder %v1084, 2
        %v1090 = vxor.u32 %v1073, 2147483648
        %v1091 = vsel %vm1089, %v1090, %v1081
        %v1092 = vsel %vm1085, %v1088, %v1091
        %v1093 = vsel %vm1082, nan, %v1092
        %v1094 = vld [vmem:[#allocation2] sm:$0xff]
        %v1095 = vld [vmem:[#allocation2 + $0x8] sm:$0xff]
        %v1096 = vld [vmem:[#allocation2 + $0x10] sm:$0xff]
        %v1097 = vld [vmem:[#allocation2 + $0x18] sm:$0xff]
        %v1098 = vld [vmem:[#allocation2 + $0x20] sm:$0xff]
        %v1099 = vld [vmem:[#allocation2 + $0x28] sm:$0xff]
        %v1100 = vld [vmem:[#allocation2 + $0x30] sm:$0xff]
        %v1101 = vld [vmem:[#allocation2 + $0x38] sm:$0xff]
        %v1102 = vld [vmem:[#allocation2 + $0x40] sm:$0xff]
        %v1103 = vld [vmem:[#allocation2 + $0x48] sm:$0xff]
        %v1104 = vld [vmem:[#allocation2 + $0x50] sm:$0xff]
        %v1105 = vld [vmem:[#allocation2 + $0x58] sm:$0xff]
        %v1106 = vld [vmem:[#allocation2 + $0x60] sm:$0xff]
        %v1107 = vld [vmem:[#allocation2 + $0x68] sm:$0xff]
        %v1108 = vld [vmem:[#allocation2 + $0x70] sm:$0xff]
        %v1109 = vld [vmem:[#allocation2 + $0x78] sm:$0xff]
        %v1110 = vld [vmem:[#allocation2 + $0x80] sm:$0xff]
        %v1111 = vld [vmem:[#allocation2 + $0x88] sm:$0xff]
        %v1112 = vld [vmem:[#allocation2 + $0x90] sm:$0xff]
        %v1113 = vld [vmem:[#allocation2 + $0x98] sm:$0xff]
        %v1114 = vld [vmem:[#allocation2 + $0xa0] sm:$0xff]
        %v1115 = vld [vmem:[#allocation2 + $0xa8] sm:$0xff]
        %v1116 = vld [vmem:[#allocation2 + $0xb0] sm:$0xff]
        %v1117 = vld [vmem:[#allocation2 + $0xb8] sm:$0xff]
        %v1118 = vld [vmem:[#allocation2 + $0xc0] sm:$0xff]
        %v1119 = vld [vmem:[#allocation2 + $0xc8] sm:$0xff]
        %v1120 = vld [vmem:[#allocation2 + $0xd0] sm:$0xff]
        %v1121 = vld [vmem:[#allocation2 + $0xd8] sm:$0xff]
        %v1122 = vld [vmem:[#allocation2 + $0xe0] sm:$0xff]
        %v1123 = vld [vmem:[#allocation2 + $0xe8] sm:$0xff]
        %v1124 = vld [vmem:[#allocation2 + $0xf0] sm:$0xff]
        %v1125 = vld [vmem:[#allocation2 + $0xf8] sm:$0xff]
        %v1126 = vld [vmem:[#allocation2 + $0x100] sm:$0xff]
        %v1127 = vld [vmem:[#allocation2 + $0x108] sm:$0xff]
        %v1128 = vld [vmem:[#allocation2 + $0x110] sm:$0xff]
        %v1129 = vld [vmem:[#allocation2 + $0x118] sm:$0xff]
        %v1130 = vld [vmem:[#allocation2 + $0x120] sm:$0xff]
        %v1131 = vld [vmem:[#allocation2 + $0x128] sm:$0xff]
        %v1132 = vld [vmem:[#allocation2 + $0x130] sm:$0xff]
        %v1133 = vld [vmem:[#allocation2 + $0x138] sm:$0xff]
        %v1134 = vld [vmem:[#allocation2 + $0x140] sm:$0xff]
        %v1135 = vld [vmem:[#allocation2 + $0x148] sm:$0xff]
        %v1136 = vld [vmem:[#allocation2 + $0x150] sm:$0xff]
        %v1137 = vld [vmem:[#allocation2 + $0x158] sm:$0xff]
        %v1138 = vld [vmem:[#allocation2 + $0x160] sm:$0xff]
        %v1139 = vld [vmem:[#allocation2 + $0x168] sm:$0xff]
        %v1140 = vld [vmem:[#allocation2 + $0x170] sm:$0xff]
        %v1141 = vld [vmem:[#allocation2 + $0x178] sm:$0xff]
        %v1142 = vld [vmem:[#allocation4] sm:$0xff]
        %v1143 = vld [vmem:[#allocation4 + $0x8] sm:$0xff]
        %v1144 = vld [vmem:[#allocation4 + $0x10] sm:$0xff]
        %v1145 = vld [vmem:[#allocation4 + $0x18] sm:$0xff]
        %v1146 = vld [vmem:[#allocation4 + $0x20] sm:$0xff]
        %v1147 = vld [vmem:[#allocation4 + $0x28] sm:$0xff]
        %v1148 = vld [vmem:[#allocation4 + $0x30] sm:$0xff]
        %v1149 = vld [vmem:[#allocation4 + $0x38] sm:$0xff]
        %v1150 = vld [vmem:[#allocation4 + $0x40] sm:$0xff]
        %v1151 = vld [vmem:[#allocation4 + $0x48] sm:$0xff]
        %v1152 = vld [vmem:[#allocation4 + $0x50] sm:$0xff]
        %v1153 = vld [vmem:[#allocation4 + $0x58] sm:$0xff]
        %v1154 = vld [vmem:[#allocation4 + $0x60] sm:$0xff]
        %v1155 = vld [vmem:[#allocation4 + $0x68] sm:$0xff]
        %v1156 = vld [vmem:[#allocation4 + $0x70] sm:$0xff]
        %v1157 = vld [vmem:[#allocation4 + $0x78] sm:$0xff]
        %v1158 = vld [vmem:[#allocation4 + $0x80] sm:$0xff]
        %v1159 = vld [vmem:[#allocation4 + $0x88] sm:$0xff]
        %v1160 = vld [vmem:[#allocation4 + $0x90] sm:$0xff]
        %v1161 = vld [vmem:[#allocation4 + $0x98] sm:$0xff]
        %v1162 = vld [vmem:[#allocation4 + $0xa0] sm:$0xff]
        %v1163 = vld [vmem:[#allocation4 + $0xa8] sm:$0xff]
        %v1164 = vld [vmem:[#allocation4 + $0xb0] sm:$0xff]
        %v1165 = vld [vmem:[#allocation4 + $0xb8] sm:$0xff]
        %v1166 = vld [vmem:[#allocation4 + $0xc0] sm:$0xff]
        %v1167 = vld [vmem:[#allocation4 + $0xc8] sm:$0xff]
        %v1168 = vld [vmem:[#allocation4 + $0xd0] sm:$0xff]
        %v1169 = vld [vmem:[#allocation4 + $0xd8] sm:$0xff]
        %v1170 = vld [vmem:[#allocation4 + $0xe0] sm:$0xff]
        %v1171 = vld [vmem:[#allocation4 + $0xe8] sm:$0xff]
        %v1172 = vld [vmem:[#allocation4 + $0xf0] sm:$0xff]
        %v1173 = vld [vmem:[#allocation4 + $0xf8] sm:$0xff]
        %v1174 = vld [vmem:[#allocation4 + $0x100] sm:$0xff]
        %v1175 = vld [vmem:[#allocation4 + $0x108] sm:$0xff]
        %v1176 = vld [vmem:[#allocation4 + $0x110] sm:$0xff]
        %v1177 = vld [vmem:[#allocation4 + $0x118] sm:$0xff]
        %v1178 = vld [vmem:[#allocation4 + $0x120] sm:$0xff]
        %v1179 = vld [vmem:[#allocation4 + $0x128] sm:$0xff]
        %v1180 = vld [vmem:[#allocation4 + $0x130] sm:$0xff]
        %v1181 = vld [vmem:[#allocation4 + $0x138] sm:$0xff]
        %v1182 = vld [vmem:[#allocation4 + $0x140] sm:$0xff]
        %v1183 = vld [vmem:[#allocation4 + $0x148] sm:$0xff]
        %v1184 = vld [vmem:[#allocation4 + $0x150] sm:$0xff]
        %v1185 = vld [vmem:[#allocation4 + $0x158] sm:$0xff]
        %v1186 = vld [vmem:[#allocation4 + $0x160] sm:$0xff]
        %v1187 = vld [vmem:[#allocation4 + $0x168] sm:$0xff]
        %v1188 = vld [vmem:[#allocation4 + $0x170] sm:$0xff]
        %v1189 = vld [vmem:[#allocation4 + $0x178] sm:$0xff]
        %1190 = vmatpush.msra.mxu0 %v1187
        %1191 = vmatpush.msra.mxu0 %v1184
        %1192 = vmatpush.msra.mxu0 %v1181
        %1193 = vmatpush.msra.mxu0 %v1178
        %1194 = vmatpush.msra.mxu0 %v1175
        %1195 = vmatpush.msra.mxu0 %v1172
        %1196 = vmatpush.msra.mxu0 %v1169
        %1197 = vmatpush.msra.mxu0 %v1166
        %1198 = vmatpush.msra.mxu0 %v1163
        %1199 = vmatpush.msra.mxu0 %v1160
        %1200 = vmatpush.msra.mxu0 %v1157
        %1201 = vmatpush.msra.mxu0 %v1154
        %1202 = vmatpush.msra.mxu0 %v1151
        %1203 = vmatpush.msra.mxu0 %v1148
        %1204 = vmatpush.msra.mxu0 %v1145
        %1205 = vmatpush.msra.mxu0 %v1142
        %1206 = vmatmul.f32.gmra.mxu0 %v938
        %v1207 = vpop.f32.mrf.mxu0
        %v1208 = vadd.f32 0.0, %v1207
        %1209 = vmatmul.f32.gmra.mxu0 %v1093
        %v1210 = vpop.f32.mrf.mxu0
        %v1211 = vadd.f32 0.0, %v1210
        %1212 = vdwg.mxu0
        %1213 = vmatpush.msra.mxu0 %v1188
        %1214 = vmatpush.msra.mxu0 %v1185
        %1215 = vmatpush.msra.mxu0 %v1182
        %1216 = vmatpush.msra.mxu0 %v1179
        %1217 = vmatpush.msra.mxu0 %v1176
        %1218 = vmatpush.msra.mxu0 %v1173
        %1219 = vmatpush.msra.mxu0 %v1170
        %1220 = vmatpush.msra.mxu0 %v1167
        %1221 = vmatpush.msra.mxu0 %v1164
        %1222 = vmatpush.msra.mxu0 %v1161
        %1223 = vmatpush.msra.mxu0 %v1158
        %1224 = vmatpush.msra.mxu0 %v1155
        %1225 = vmatpush.msra.mxu0 %v1152
        %1226 = vmatpush.msra.mxu0 %v1149
        %1227 = vmatpush.msra.mxu0 %v1146
        %1228 = vmatpush.msra.mxu0 %v1143
        %1229 = vmatmul.f32.gmra.mxu0 %v938
        %v1230 = vpop.f32.mrf.mxu0
        %v1231 = vadd.f32 0.0, %v1230
        %1232 = vmatmul.f32.gmra.mxu0 %v1093
        %v1233 = vpop.f32.mrf.mxu0
        %v1234 = vadd.f32 0.0, %v1233
        %1235 = vdwg.mxu0
        %1236 = vmatpush.msra.mxu0 %v1189
        %1237 = vmatpush.msra.mxu0 %v1186
        %1238 = vmatpush.msra.mxu0 %v1183
        %1239 = vmatpush.msra.mxu0 %v1180
        %1240 = vmatpush.msra.mxu0 %v1177
        %1241 = vmatpush.msra.mxu0 %v1174
        %1242 = vmatpush.msra.mxu0 %v1171
        %1243 = vmatpush.msra.mxu0 %v1168
        %1244 = vmatpush.msra.mxu0 %v1165
        %1245 = vmatpush.msra.mxu0 %v1162
        %1246 = vmatpush.msra.mxu0 %v1159
        %1247 = vmatpush.msra.mxu0 %v1156
        %1248 = vmatpush.msra.mxu0 %v1153
        %1249 = vmatpush.msra.mxu0 %v1150
        %1250 = vmatpush.msra.mxu0 %v1147
        %1251 = vmatpush.msra.mxu0 %v1144
        %1252 = vmatmul.f32.gmra.mxu0 %v938
        %v1253 = vpop.f32.mrf.mxu0
        %v1254 = vadd.f32 0.0, %v1253
        %1255 = vmatmul.f32.gmra.mxu0 %v1093
        %v1256 = vpop.f32.mrf.mxu0
        %v1257 = vadd.f32 0.0, %v1256
        %1258 = vdwg.mxu0
        %1259 = vmatpush.msra.mxu0 %v1139
        %1260 = vmatpush.msra.mxu0 %v1136
        %1261 = vmatpush.msra.mxu0 %v1133
        %1262 = vmatpush.msra.mxu0 %v1130
        %1263 = vmatpush.msra.mxu0 %v1127
        %1264 = vmatpush.msra.mxu0 %v1124
        %1265 = vmatpush.msra.mxu0 %v1121
        %1266 = vmatpush.msra.mxu0 %v1118
        %1267 = vmatpush.msra.mxu0 %v1115
        %1268 = vmatpush.msra.mxu0 %v1112
        %1269 = vmatpush.msra.mxu0 %v1109
        %1270 = vmatpush.msra.mxu0 %v1106
        %1271 = vmatpush.msra.mxu0 %v1103
        %1272 = vmatpush.msra.mxu0 %v1100
        %1273 = vmatpush.msra.mxu0 %v1097
        %1274 = vmatpush.msra.mxu0 %v1094
        %1275 = vmatmul.f32.gmra.mxu0 %v629
        %v1276 = vpop.f32.mrf.mxu0
        %v1277 = vadd.f32 %v1208, %v1276
        %1278 = vmatmul.f32.gmra.mxu0 %v783
        %v1279 = vpop.f32.mrf.mxu0
        %v1280 = vadd.f32 %v1211, %v1279
        %1281 = vdwg.mxu0
        %1282 = vmatpush.msra.mxu0 %v1140
        %1283 = vmatpush.msra.mxu0 %v1137
        %1284 = vmatpush.msra.mxu0 %v1134
        %1285 = vmatpush.msra.mxu0 %v1131
        %1286 = vmatpush.msra.mxu0 %v1128
        %1287 = vmatpush.msra.mxu0 %v1125
        %1288 = vmatpush.msra.mxu0 %v1122
        %1289 = vmatpush.msra.mxu0 %v1119
        %1290 = vmatpush.msra.mxu0 %v1116
        %1291 = vmatpush.msra.mxu0 %v1113
        %1292 = vmatpush.msra.mxu0 %v1110
        %1293 = vmatpush.msra.mxu0 %v1107
        %1294 = vmatpush.msra.mxu0 %v1104
        %1295 = vmatpush.msra.mxu0 %v1101
        %1296 = vmatpush.msra.mxu0 %v1098
        %1297 = vmatpush.msra.mxu0 %v1095
        %1298 = vmatmul.f32.gmra.mxu0 %v629
        %v1299 = vpop.f32.mrf.mxu0
        %v1300 = vadd.f32 %v1231, %v1299
        %1301 = vmatmul.f32.gmra.mxu0 %v783
        %v1302 = vpop.f32.mrf.mxu0
        %v1303 = vadd.f32 %v1234, %v1302
        %1304 = vdwg.mxu0
        %1305 = vmatpush.msra.mxu0 %v1141
        %1306 = vmatpush.msra.mxu0 %v1138
        %1307 = vmatpush.msra.mxu0 %v1135
        %1308 = vmatpush.msra.mxu0 %v1132
        %1309 = vmatpush.msra.mxu0 %v1129
        %1310 = vmatpush.msra.mxu0 %v1126
        %1311 = vmatpush.msra.mxu0 %v1123
        %1312 = vmatpush.msra.mxu0 %v1120
        %1313 = vmatpush.msra.mxu0 %v1117
        %1314 = vmatpush.msra.mxu0 %v1114
        %1315 = vmatpush.msra.mxu0 %v1111
        %1316 = vmatpush.msra.mxu0 %v1108
        %1317 = vmatpush.msra.mxu0 %v1105
        %1318 = vmatpush.msra.mxu0 %v1102
        %1319 = vmatpush.msra.mxu0 %v1099
        %1320 = vmatpush.msra.mxu0 %v1096
        %1321 = vmatmul.f32.gmra.mxu0 %v629
        %v1322 = vpop.f32.mrf.mxu0
        %v1323 = vadd.f32 %v1254, %v1322
        %1324 = vmatmul.f32.gmra.mxu0 %v783
        %v1325 = vpop.f32.mrf.mxu0
        %v1326 = vadd.f32 %v1257, %v1325
        %1327 = vdwg.mxu0
        %v1328 = vld [vmem:[#allocation6] sm:$0x7]
        %v1330 = vperm.slane %v1328, 0
        %v1331 = vperm.slane %v1328, 1
        %v1332 = vperm.slane %v1328, 2
        %v1336 = vadd.f32 %v1277, %v1330
        %v1337 = vadd.f32 %v1300, %v1331
        %v1338 = vadd.f32 %v1323, %v1332
        %v1339 = vadd.f32 %v1280, %v1330
        %v1340 = vadd.f32 %v1303, %v1331
        %v1341 = vadd.f32 %v1326, %v1332
        %v1342 = vxor.u32 %v1336, 2147483648
        %v1343 = vxor.u32 %v1337, 2147483648
        %v1344 = vxor.u32 %v1338, 2147483648
        %v1345 = vxor.u32 %v1339, 2147483648
        %v1346 = vxor.u32 %v1340, 2147483648
        %v1347 = vxor.u32 %v1341, 2147483648
        %v1348 = vmul.f32 %v1342, 1.442695
        %v1349 = vpow.pop %v1348
        %v1350 = vmul.f32 %v1343, 1.442695
        %v1351 = vpow.pop %v1350
        %v1352 = vmul.f32 %v1344, 1.442695
        %v1353 = vpow.pop %v1352
        %v1354 = vmul.f32 %v1345, 1.442695
        %v1355 = vpow.pop %v1354
        %v1356 = vmul.f32 %v1346, 1.442695
        %v1357 = vpow.pop %v1356
        %v1358 = vmul.f32 %v1347, 1.442695
        %v1359 = vpow.pop %v1358
        %v1360 = vadd.f32 %v1349, 1.0
        %v1361 = vadd.f32 %v1351, 1.0
        %v1362 = vadd.f32 %v1353, 1.0
        %v1363 = vadd.f32 %v1355, 1.0
        %v1364 = vadd.f32 %v1357, 1.0
        %v1365 = vadd.f32 %v1359, 1.0
        %v1366 = vrcp.pop %v1360
        %v1367 = vmul.f32 %v1360, %v1366
        %v1368 = vsub.f32 1.0, %v1367
        %v1369 = vmul.f32 %v1366, %v1368
        %v1370 = vadd.f32 %v1366, %v1369
        %vm1371 = vweird.f32 %v1360
        %vm1372 = vweird.f32 %v1366
        %vm1373 = vmor %vm1371, %vm1372
        %v1374 = vsel %vm1373, %v1366, %v1370
        %v1375 = vand.u32 2147483647, %v1360
        %vm1376 = vcmp.eq.f32.partialorder %v1375, 8.507059e+37
        %v1377 = vand.u32 %v1360, 2147483648
        %v1378 = vor.u32 1.1754944e-38, %v1377
        %v1379 = vsel %vm1376, %v1378, %v1374
        %v1380 = vmul.f32 1.0, %v1379
        %v1381 = vrcp.pop %v1361
        %v1382 = vmul.f32 %v1361, %v1381
        %v1383 = vsub.f32 1.0, %v1382
        %v1384 = vmul.f32 %v1381, %v1383
        %v1385 = vadd.f32 %v1381, %v1384
        %vm1386 = vweird.f32 %v1361
        %vm1387 = vweird.f32 %v1381
        %vm1388 = vmor %vm1386, %vm1387
        %v1389 = vsel %vm1388, %v1381, %v1385
        %v1390 = vand.u32 2147483647, %v1361
        %vm1391 = vcmp.eq.f32.partialorder %v1390, 8.507059e+37
        %v1392 = vand.u32 %v1361, 2147483648
        %v1393 = vor.u32 1.1754944e-38, %v1392
        %v1394 = vsel %vm1391, %v1393, %v1389
        %v1395 = vmul.f32 1.0, %v1394
        %v1396 = vrcp.pop %v1362
        %v1397 = vmul.f32 %v1362, %v1396
        %v1398 = vsub.f32 1.0, %v1397
        %v1399 = vmul.f32 %v1396, %v1398
        %v1400 = vadd.f32 %v1396, %v1399
        %vm1401 = vweird.f32 %v1362
        %vm1402 = vweird.f32 %v1396
        %vm1403 = vmor %vm1401, %vm1402
        %v1404 = vsel %vm1403, %v1396, %v1400
        %v1405 = vand.u32 2147483647, %v1362
        %vm1406 = vcmp.eq.f32.partialorder %v1405, 8.507059e+37
        %v1407 = vand.u32 %v1362, 2147483648
        %v1408 = vor.u32 1.1754944e-38, %v1407
        %v1409 = vsel %vm1406, %v1408, %v1404
        %v1410 = vmul.f32 1.0, %v1409
        %v1411 = vrcp.pop %v1363
        %v1412 = vmul.f32 %v1363, %v1411
        %v1413 = vsub.f32 1.0, %v1412
        %v1414 = vmul.f32 %v1411, %v1413
        %v1415 = vadd.f32 %v1411, %v1414
        %vm1416 = vweird.f32 %v1363
        %vm1417 = vweird.f32 %v1411
        %vm1418 = vmor %vm1416, %vm1417
        %v1419 = vsel %vm1418, %v1411, %v1415
        %v1420 = vand.u32 2147483647, %v1363
        %vm1421 = vcmp.eq.f32.partialorder %v1420, 8.507059e+37
        %v1422 = vand.u32 %v1363, 2147483648
        %v1423 = vor.u32 1.1754944e-38, %v1422
        %v1424 = vsel %vm1421, %v1423, %v1419
        %v1425 = vmul.f32 1.0, %v1424
        %v1426 = vrcp.pop %v1364
        %v1427 = vmul.f32 %v1364, %v1426
        %v1428 = vsub.f32 1.0, %v1427
        %v1429 = vmul.f32 %v1426, %v1428
        %v1430 = vadd.f32 %v1426, %v1429
        %vm1431 = vweird.f32 %v1364
        %vm1432 = vweird.f32 %v1426
        %vm1433 = vmor %vm1431, %vm1432
        %v1434 = vsel %vm1433, %v1426, %v1430
        %v1435 = vand.u32 2147483647, %v1364
        %vm1436 = vcmp.eq.f32.partialorder %v1435, 8.507059e+37
        %v1437 = vand.u32 %v1364, 2147483648
        %v1438 = vor.u32 1.1754944e-38, %v1437
        %v1439 = vsel %vm1436, %v1438, %v1434
        %v1440 = vmul.f32 1.0, %v1439
        %v1441 = vrcp.pop %v1365
        %v1442 = vmul.f32 %v1365, %v1441
        %v1443 = vsub.f32 1.0, %v1442
        %v1444 = vmul.f32 %v1441, %v1443
        %v1445 = vadd.f32 %v1441, %v1444
        %vm1446 = vweird.f32 %v1365
        %vm1447 = vweird.f32 %v1441
        %vm1448 = vmor %vm1446, %vm1447
        %v1449 = vsel %vm1448, %v1441, %v1445
        %v1450 = vand.u32 2147483647, %v1365
        %vm1451 = vcmp.eq.f32.partialorder %v1450, 8.507059e+37
        %v1452 = vand.u32 %v1365, 2147483648
        %v1453 = vor.u32 1.1754944e-38, %v1452
        %v1454 = vsel %vm1451, %v1453, %v1449
        %v1455 = vmul.f32 1.0, %v1454
        %v1456 = vmul.f32 %v1336, %v1380
        %v1457 = vmul.f32 %v1337, %v1395
        %v1458 = vmul.f32 %v1338, %v1410
        %v1459 = vmul.f32 %v1339, %v1425
        %v1460 = vmul.f32 %v1340, %v1440
        %v1461 = vmul.f32 %v1341, %v1455
        %v1462 = vpack.c.bf16 %v1459, %v1456
        %v1463 = vpack.c.bf16 %v1460, %v1457
        %v1464 = vpack.c.bf16 %v1461, %v1458
        %v1465 = vld [vmem:[#allocation7] sm:$0xff]
        %v1466 = vld [vmem:[#allocation7 + $0x8] sm:$0xf]
        %v1467 = vld [vmem:[#allocation7 + $0xc] sm:$0xff]
        %v1468 = vld [vmem:[#allocation7 + $0x14] sm:$0xf]
        %v1469 = vld [vmem:[#allocation7 + $0x18] sm:$0xff]
        %v1470 = vld [vmem:[#allocation7 + $0x20] sm:$0xf]
        %v1471 = vld [vmem:[#allocation7 + $0x24] sm:$0xff]
        %v1472 = vld [vmem:[#allocation7 + $0x2c] sm:$0xf]
        %v1473 = vld [vmem:[#allocation7 + $0x30] sm:$0xff]
        %v1474 = vld [vmem:[#allocation7 + $0x38] sm:$0xf]
        %v1475 = vld [vmem:[#allocation7 + $0x3c] sm:$0xff]
        %v1476 = vld [vmem:[#allocation7 + $0x44] sm:$0xf]
        %v1477 = vld [vmem:[#allocation7 + $0x48] sm:$0xff]
        %v1478 = vld [vmem:[#allocation7 + $0x50] sm:$0xf]
        %v1479 = vld [vmem:[#allocation7 + $0x54] sm:$0xff]
        %v1480 = vld [vmem:[#allocation7 + $0x5c] sm:$0xf]
        %v1481 = vld [vmem:[#allocation7 + $0x60] sm:$0xff]
        %v1482 = vld [vmem:[#allocation7 + $0x68] sm:$0xf]
        %v1483 = vld [vmem:[#allocation7 + $0x6c] sm:$0xff]
        %v1484 = vld [vmem:[#allocation7 + $0x74] sm:$0xf]
        %v1485 = vld [vmem:[#allocation7 + $0x78] sm:$0xff]
        %v1486 = vld [vmem:[#allocation7 + $0x80] sm:$0xf]
        %v1487 = vld [vmem:[#allocation7 + $0x84] sm:$0xff]
        %v1488 = vld [vmem:[#allocation7 + $0x8c] sm:$0xf]
        %v1489 = vld [vmem:[#allocation7 + $0x90] sm:$0xff]
        %v1490 = vld [vmem:[#allocation7 + $0x98] sm:$0xf]
        %v1491 = vld [vmem:[#allocation7 + $0x9c] sm:$0xff]
        %v1492 = vld [vmem:[#allocation7 + $0xa4] sm:$0xf]
        %v1493 = vld [vmem:[#allocation7 + $0xa8] sm:$0xff]
        %v1494 = vld [vmem:[#allocation7 + $0xb0] sm:$0xf]
        %v1495 = vld [vmem:[#allocation7 + $0xb4] sm:$0xff]
        %v1496 = vld [vmem:[#allocation7 + $0xbc] sm:$0xf]
        %v1497 = vld [vmem:[#allocation7 + $0xc0] sm:$0xff]
        %v1498 = vld [vmem:[#allocation7 + $0xc8] sm:$0xf]
        %v1499 = vld [vmem:[#allocation7 + $0xcc] sm:$0xff]
        %v1500 = vld [vmem:[#allocation7 + $0xd4] sm:$0xf]
        %v1501 = vld [vmem:[#allocation7 + $0xd8] sm:$0xff]
        %v1502 = vld [vmem:[#allocation7 + $0xe0] sm:$0xf]
        %v1503 = vld [vmem:[#allocation7 + $0xe4] sm:$0xff]
        %v1504 = vld [vmem:[#allocation7 + $0xec] sm:$0xf]
        %v1505 = vld [vmem:[#allocation7 + $0xf0] sm:$0xff]
        %v1506 = vld [vmem:[#allocation7 + $0xf8] sm:$0xf]
        %v1507 = vld [vmem:[#allocation7 + $0xfc] sm:$0xff]
        %v1508 = vld [vmem:[#allocation7 + $0x104] sm:$0xf]
        %v1509 = vld [vmem:[#allocation7 + $0x108] sm:$0xff]
        %v1510 = vld [vmem:[#allocation7 + $0x110] sm:$0xf]
        %v1511 = vld [vmem:[#allocation7 + $0x114] sm:$0xff]
        %v1512 = vld [vmem:[#allocation7 + $0x11c] sm:$0xf]
        %v1513 = vld [vmem:[#allocation7 + $0x120] sm:$0xff]
        %v1514 = vld [vmem:[#allocation7 + $0x128] sm:$0xf]
        %v1515 = vld [vmem:[#allocation7 + $0x12c] sm:$0xff]
        %v1516 = vld [vmem:[#allocation7 + $0x134] sm:$0xf]
        %v1517 = vld [vmem:[#allocation7 + $0x138] sm:$0xff]
        %v1518 = vld [vmem:[#allocation7 + $0x140] sm:$0xf]
        %v1519 = vld [vmem:[#allocation7 + $0x144] sm:$0xff]
        %v1520 = vld [vmem:[#allocation7 + $0x14c] sm:$0xf]
        %v1521 = vld [vmem:[#allocation7 + $0x150] sm:$0xff]
        %v1522 = vld [vmem:[#allocation7 + $0x158] sm:$0xf]
        %v1523 = vld [vmem:[#allocation7 + $0x15c] sm:$0xff]
        %v1524 = vld [vmem:[#allocation7 + $0x164] sm:$0xf]
        %v1525 = vld [vmem:[#allocation7 + $0x168] sm:$0xff]
        %v1526 = vld [vmem:[#allocation7 + $0x170] sm:$0xf]
        %v1527 = vld [vmem:[#allocation7 + $0x174] sm:$0xff]
        %v1528 = vld [vmem:[#allocation7 + $0x17c] sm:$0xf]
        %v1529 = vld [vmem:[#allocation7 + $0x180] sm:$0xff]
        %v1530 = vld [vmem:[#allocation7 + $0x188] sm:$0xf]
        %v1531 = vld [vmem:[#allocation7 + $0x18c] sm:$0xff]
        %v1532 = vld [vmem:[#allocation7 + $0x194] sm:$0xf]
        %v1533 = vld [vmem:[#allocation7 + $0x198] sm:$0xff]
        %v1534 = vld [vmem:[#allocation7 + $0x1a0] sm:$0xf]
        %v1535 = vld [vmem:[#allocation7 + $0x1a4] sm:$0xff]
        %v1536 = vld [vmem:[#allocation7 + $0x1ac] sm:$0xf]
        %v1537 = vld [vmem:[#allocation7 + $0x1b0] sm:$0xff]
        %v1538 = vld [vmem:[#allocation7 + $0x1b8] sm:$0xf]
        %v1539 = vld [vmem:[#allocation7 + $0x1bc] sm:$0xff]
        %v1540 = vld [vmem:[#allocation7 + $0x1c4] sm:$0xf]
        %v1541 = vld [vmem:[#allocation7 + $0x1c8] sm:$0xff]
        %v1542 = vld [vmem:[#allocation7 + $0x1d0] sm:$0xf]
        %v1543 = vld [vmem:[#allocation7 + $0x1d4] sm:$0xff]
        %v1544 = vld [vmem:[#allocation7 + $0x1dc] sm:$0xf]
        %v1545 = vld [vmem:[#allocation7 + $0x1e0] sm:$0xff]
        %v1546 = vld [vmem:[#allocation7 + $0x1e8] sm:$0xf]
        %v1547 = vld [vmem:[#allocation7 + $0x1ec] sm:$0xff]
        %v1548 = vld [vmem:[#allocation7 + $0x1f4] sm:$0xf]
        %v1549 = vld [vmem:[#allocation7 + $0x1f8] sm:$0xff]
        %v1550 = vld [vmem:[#allocation7 + $0x200] sm:$0xf]
        %v1551 = vld [vmem:[#allocation7 + $0x204] sm:$0xff]
        %v1552 = vld [vmem:[#allocation7 + $0x20c] sm:$0xf]
        %v1553 = vld [vmem:[#allocation7 + $0x210] sm:$0xff]
        %v1554 = vld [vmem:[#allocation7 + $0x218] sm:$0xf]
        %v1555 = vld [vmem:[#allocation7 + $0x21c] sm:$0xff]
        %v1556 = vld [vmem:[#allocation7 + $0x224] sm:$0xf]
        %v1557 = vld [vmem:[#allocation7 + $0x228] sm:$0xff]
        %v1558 = vld [vmem:[#allocation7 + $0x230] sm:$0xf]
        %v1559 = vld [vmem:[#allocation7 + $0x234] sm:$0xff]
        %v1560 = vld [vmem:[#allocation7 + $0x23c] sm:$0xf]
        %v1561 = vld [vmem:[#allocation9] sm:$0x7]
        %v1563 = vperm.slane %v1561, 0
        %v1564 = vperm.slane %v1561, 1
        %v1565 = vperm.slane %v1561, 2
        %v1665 = vunpack.c.l.b16 %v1465
        %v1666 = vunpack.c.h.b16 %v1465
        %v1667 = vunpack.c.l.b16 %v1466
        %v1668 = vunpack.c.l.b16 %v1467
        %v1669 = vunpack.c.h.b16 %v1467
        %v1670 = vunpack.c.l.b16 %v1468
        %v1671 = vunpack.c.l.b16 %v1469
        %v1672 = vunpack.c.h.b16 %v1469
        %v1673 = vunpack.c.l.b16 %v1470
        %v1674 = vunpack.c.l.b16 %v1471
        %v1675 = vunpack.c.h.b16 %v1471
        %v1676 = vunpack.c.l.b16 %v1472
        %v1677 = vunpack.c.l.b16 %v1473
        %v1678 = vunpack.c.h.b16 %v1473
        %v1679 = vunpack.c.l.b16 %v1474
        %v1680 = vunpack.c.l.b16 %v1475
        %v1681 = vunpack.c.h.b16 %v1475
        %v1682 = vunpack.c.l.b16 %v1476
        %v1683 = vunpack.c.l.b16 %v1477
        %v1684 = vunpack.c.h.b16 %v1477
        %v1685 = vunpack.c.l.b16 %v1478
        %v1686 = vunpack.c.l.b16 %v1479
        %v1687 = vunpack.c.h.b16 %v1479
        %v1688 = vunpack.c.l.b16 %v1480
        %v1689 = vunpack.c.l.b16 %v1481
        %v1690 = vunpack.c.h.b16 %v1481
        %v1691 = vunpack.c.l.b16 %v1482
        %v1692 = vunpack.c.l.b16 %v1483
        %v1693 = vunpack.c.h.b16 %v1483
        %v1694 = vunpack.c.l.b16 %v1484
        %v1695 = vunpack.c.l.b16 %v1485
        %v1696 = vunpack.c.h.b16 %v1485
        %v1697 = vunpack.c.l.b16 %v1486
        %v1698 = vunpack.c.l.b16 %v1487
        %v1699 = vunpack.c.h.b16 %v1487
        %v1700 = vunpack.c.l.b16 %v1488
        %v1701 = vunpack.c.l.b16 %v1489
        %v1702 = vunpack.c.h.b16 %v1489
        %v1703 = vunpack.c.l.b16 %v1490
        %v1704 = vunpack.c.l.b16 %v1491
        %v1705 = vunpack.c.h.b16 %v1491
        %v1706 = vunpack.c.l.b16 %v1492
        %v1707 = vunpack.c.l.b16 %v1493
        %v1708 = vunpack.c.h.b16 %v1493
        %v1709 = vunpack.c.l.b16 %v1494
        %v1710 = vunpack.c.l.b16 %v1495
        %v1711 = vunpack.c.h.b16 %v1495
        %v1712 = vunpack.c.l.b16 %v1496
        %v1713 = vunpack.c.l.b16 %v1497
        %v1714 = vunpack.c.h.b16 %v1497
        %v1715 = vunpack.c.l.b16 %v1498
        %v1716 = vunpack.c.l.b16 %v1499
        %v1717 = vunpack.c.h.b16 %v1499
        %v1718 = vunpack.c.l.b16 %v1500
        %v1719 = vunpack.c.l.b16 %v1501
        %v1720 = vunpack.c.h.b16 %v1501
        %v1721 = vunpack.c.l.b16 %v1502
        %v1722 = vunpack.c.l.b16 %v1503
        %v1723 = vunpack.c.h.b16 %v1503
        %v1724 = vunpack.c.l.b16 %v1504
        %v1725 = vunpack.c.l.b16 %v1505
        %v1726 = vunpack.c.h.b16 %v1505
        %v1727 = vunpack.c.l.b16 %v1506
        %v1728 = vunpack.c.l.b16 %v1507
        %v1729 = vunpack.c.h.b16 %v1507
        %v1730 = vunpack.c.l.b16 %v1508
        %v1731 = vunpack.c.l.b16 %v1509
        %v1732 = vunpack.c.h.b16 %v1509
        %v1733 = vunpack.c.l.b16 %v1510
        %v1734 = vunpack.c.l.b16 %v1511
        %v1735 = vunpack.c.h.b16 %v1511
        %v1736 = vunpack.c.l.b16 %v1512
        %v1737 = vunpack.c.l.b16 %v1513
        %v1738 = vunpack.c.h.b16 %v1513
        %v1739 = vunpack.c.l.b16 %v1514
        %v1740 = vunpack.c.l.b16 %v1515
        %v1741 = vunpack.c.h.b16 %v1515
        %v1742 = vunpack.c.l.b16 %v1516
        %v1743 = vunpack.c.l.b16 %v1517
        %v1744 = vunpack.c.h.b16 %v1517
        %v1745 = vunpack.c.l.b16 %v1518
        %v1746 = vunpack.c.l.b16 %v1519
        %v1747 = vunpack.c.h.b16 %v1519
        %v1748 = vunpack.c.l.b16 %v1520
        %v1749 = vunpack.c.l.b16 %v1521
        %v1750 = vunpack.c.h.b16 %v1521
        %v1751 = vunpack.c.l.b16 %v1522
        %v1752 = vunpack.c.l.b16 %v1523
        %v1753 = vunpack.c.h.b16 %v1523
        %v1754 = vunpack.c.l.b16 %v1524
        %v1755 = vunpack.c.l.b16 %v1525
        %v1756 = vunpack.c.h.b16 %v1525
        %v1757 = vunpack.c.l.b16 %v1526
        %v1758 = vunpack.c.l.b16 %v1527
        %v1759 = vunpack.c.h.b16 %v1527
        %v1760 = vunpack.c.l.b16 %v1528
        %v1761 = vunpack.c.l.b16 %v1529
        %v1762 = vunpack.c.h.b16 %v1529
        %v1763 = vunpack.c.l.b16 %v1530
        %v1764 = vunpack.c.l.b16 %v1531
        %v1765 = vunpack.c.h.b16 %v1531
        %v1766 = vunpack.c.l.b16 %v1532
        %v1767 = vunpack.c.l.b16 %v1533
        %v1768 = vunpack.c.h.b16 %v1533
        %v1769 = vunpack.c.l.b16 %v1534
        %v1770 = vunpack.c.l.b16 %v1535
        %v1771 = vunpack.c.h.b16 %v1535
        %v1772 = vunpack.c.l.b16 %v1536
        %v1773 = vunpack.c.l.b16 %v1537
        %v1774 = vunpack.c.h.b16 %v1537
        %v1775 = vunpack.c.l.b16 %v1538
        %v1776 = vunpack.c.l.b16 %v1539
        %v1777 = vunpack.c.h.b16 %v1539
        %v1778 = vunpack.c.l.b16 %v1540
        %v1779 = vunpack.c.l.b16 %v1541
        %v1780 = vunpack.c.h.b16 %v1541
        %v1781 = vunpack.c.l.b16 %v1542
        %v1782 = vunpack.c.l.b16 %v1543
        %v1783 = vunpack.c.h.b16 %v1543
        %v1784 = vunpack.c.l.b16 %v1544
        %v1785 = vunpack.c.l.b16 %v1545
        %v1786 = vunpack.c.h.b16 %v1545
        %v1787 = vunpack.c.l.b16 %v1546
        %v1788 = vunpack.c.l.b16 %v1547
        %v1789 = vunpack.c.h.b16 %v1547
        %v1790 = vunpack.c.l.b16 %v1548
        %v1791 = vunpack.c.l.b16 %v1549
        %v1792 = vunpack.c.h.b16 %v1549
        %v1793 = vunpack.c.l.b16 %v1550
        %v1794 = vunpack.c.l.b16 %v1551
        %v1795 = vunpack.c.h.b16 %v1551
        %v1796 = vunpack.c.l.b16 %v1552
        %v1797 = vunpack.c.l.b16 %v1553
        %v1798 = vunpack.c.h.b16 %v1553
        %v1799 = vunpack.c.l.b16 %v1554
        %v1800 = vunpack.c.l.b16 %v1555
        %v1801 = vunpack.c.h.b16 %v1555
        %v1802 = vunpack.c.l.b16 %v1556
        %v1803 = vunpack.c.l.b16 %v1557
        %v1804 = vunpack.c.h.b16 %v1557
        %v1805 = vunpack.c.l.b16 %v1558
        %v1806 = vunpack.c.l.b16 %v1559
        %v1807 = vunpack.c.h.b16 %v1559
        %v1808 = vunpack.c.l.b16 %v1560
        %v1809 = vpack.c.b16 %v1668, %v1665
        %v1810 = vpack.c.b16 %v1669, %v1666
        %v1811 = vpack.c.b16 %v1670, %v1667
        %v1812 = vpack.c.b16 %v1674, %v1671
        %v1813 = vpack.c.b16 %v1675, %v1672
        %v1814 = vpack.c.b16 %v1676, %v1673
        %v1815 = vpack.c.b16 %v1680, %v1677
        %v1816 = vpack.c.b16 %v1681, %v1678
        %v1817 = vpack.c.b16 %v1682, %v1679
        %v1818 = vpack.c.b16 %v1686, %v1683
        %v1819 = vpack.c.b16 %v1687, %v1684
        %v1820 = vpack.c.b16 %v1688, %v1685
        %v1821 = vpack.c.b16 %v1692, %v1689
        %v1822 = vpack.c.b16 %v1693, %v1690
        %v1823 = vpack.c.b16 %v1694, %v1691
        %v1824 = vpack.c.b16 %v1698, %v1695
        %v1825 = vpack.c.b16 %v1699, %v1696
        %v1826 = vpack.c.b16 %v1700, %v1697
        %v1827 = vpack.c.b16 %v1704, %v1701
        %v1828 = vpack.c.b16 %v1705, %v1702
        %v1829 = vpack.c.b16 %v1706, %v1703
        %v1830 = vpack.c.b16 %v1710, %v1707
        %v1831 = vpack.c.b16 %v1711, %v1708
        %v1832 = vpack.c.b16 %v1712, %v1709
        %v1833 = vpack.c.b16 %v1716, %v1713
        %v1834 = vpack.c.b16 %v1717, %v1714
        %v1835 = vpack.c.b16 %v1718, %v1715
        %v1836 = vpack.c.b16 %v1722, %v1719
        %v1837 = vpack.c.b16 %v1723, %v1720
        %v1838 = vpack.c.b16 %v1724, %v1721
        %v1839 = vpack.c.b16 %v1728, %v1725
        %v1840 = vpack.c.b16 %v1729, %v1726
        %v1841 = vpack.c.b16 %v1730, %v1727
        %v1842 = vpack.c.b16 %v1734, %v1731
        %v1843 = vpack.c.b16 %v1735, %v1732
        %v1844 = vpack.c.b16 %v1736, %v1733
        %v1845 = vpack.c.b16 %v1740, %v1737
        %v1846 = vpack.c.b16 %v1741, %v1738
        %v1847 = vpack.c.b16 %v1742, %v1739
        %v1848 = vpack.c.b16 %v1746, %v1743
        %v1849 = vpack.c.b16 %v1747, %v1744
        %v1850 = vpack.c.b16 %v1748, %v1745
        %v1851 = vpack.c.b16 %v1752, %v1749
        %v1852 = vpack.c.b16 %v1753, %v1750
        %v1853 = vpack.c.b16 %v1754, %v1751
        %v1854 = vpack.c.b16 %v1758, %v1755
        %v1855 = vpack.c.b16 %v1759, %v1756
        %v1856 = vpack.c.b16 %v1760, %v1757
        %v1857 = vpack.c.b16 %v1764, %v1761
        %v1858 = vpack.c.b16 %v1765, %v1762
        %v1859 = vpack.c.b16 %v1766, %v1763
        %v1860 = vpack.c.b16 %v1770, %v1767
        %v1861 = vpack.c.b16 %v1771, %v1768
        %v1862 = vpack.c.b16 %v1772, %v1769
        %v1863 = vpack.c.b16 %v1776, %v1773
        %v1864 = vpack.c.b16 %v1777, %v1774
        %v1865 = vpack.c.b16 %v1778, %v1775
        %v1866 = vpack.c.b16 %v1782, %v1779
        %v1867 = vpack.c.b16 %v1783, %v1780
        %v1868 = vpack.c.b16 %v1784, %v1781
        %v1869 = vpack.c.b16 %v1788, %v1785
        %v1870 = vpack.c.b16 %v1789, %v1786
        %v1871 = vpack.c.b16 %v1790, %v1787
        %v1872 = vpack.c.b16 %v1794, %v1791
        %v1873 = vpack.c.b16 %v1795, %v1792
        %v1874 = vpack.c.b16 %v1796, %v1793
        %v1875 = vpack.c.b16 %v1800, %v1797
        %v1876 = vpack.c.b16 %v1801, %v1798
        %v1877 = vpack.c.b16 %v1802, %v1799
        %v1878 = vpack.c.b16 %v1806, %v1803
        %v1879 = vpack.c.b16 %v1807, %v1804
        %v1880 = vpack.c.b16 %v1808, %v1805
        %1953 = vmatpush.bf16.msra.mxu0 %v1830
        %1954 = vmatpush.bf16.msra.mxu0 %v1827
        %1955 = vmatpush.bf16.msra.mxu0 %v1824
        %1956 = vmatpush.bf16.msra.mxu0 %v1821
        %1957 = vmatpush.bf16.msra.mxu0 %v1818
        %1958 = vmatpush.bf16.msra.mxu0 %v1815
        %1959 = vmatpush.bf16.msra.mxu0 %v1812
        %1960 = vmatpush.bf16.msra.mxu0 %v1809
        %1961 = vmatmul.bf16.gmra.mxu0 %v1462
        %v1962 = vpop.f32.mrf.mxu0
        %v1963 = vadd.f32 %v1563, %v1962
        %v1964 = vpop.f32.mrf.mxu0
        %v1965 = vadd.f32 %v1563, %v1964
        %1966 = vdwg.mxu0
        %1967 = vmatpush.bf16.msra.mxu0 %v1854
        %1968 = vmatpush.bf16.msra.mxu0 %v1851
        %1969 = vmatpush.bf16.msra.mxu0 %v1848
        %1970 = vmatpush.bf16.msra.mxu0 %v1845
        %1971 = vmatpush.bf16.msra.mxu0 %v1842
        %1972 = vmatpush.bf16.msra.mxu0 %v1839
        %1973 = vmatpush.bf16.msra.mxu0 %v1836
        %1974 = vmatpush.bf16.msra.mxu0 %v1833
        %1975 = vmatmul.bf16.gmra.mxu0 %v1463
        %v1976 = vpop.f32.mrf.mxu0
        %v1977 = vadd.f32 %v1963, %v1976
        %v1978 = vpop.f32.mrf.mxu0
        %v1979 = vadd.f32 %v1965, %v1978
        %1980 = vdwg.mxu0
        %1981 = vmatpush.bf16.msra.mxu0 %v1878
        %1982 = vmatpush.bf16.msra.mxu0 %v1875
        %1983 = vmatpush.bf16.msra.mxu0 %v1872
        %1984 = vmatpush.bf16.msra.mxu0 %v1869
        %1985 = vmatpush.bf16.msra.mxu0 %v1866
        %1986 = vmatpush.bf16.msra.mxu0 %v1863
        %1987 = vmatpush.bf16.msra.mxu0 %v1860
        %1988 = vmatpush.bf16.msra.mxu0 %v1857
        %1989 = vmatmul.bf16.gmra.mxu0 %v1464
        %v1990 = vpop.f32.mrf.mxu0
        %v1991 = vadd.f32 %v1977, %v1990
        %v1992 = vpop.f32.mrf.mxu0
        %v1993 = vadd.f32 %v1979, %v1992
        %1994 = vdwg.mxu0
        %1995 = vmatpush.bf16.msra.mxu0 %v1831
        %1996 = vmatpush.bf16.msra.mxu0 %v1828
        %1997 = vmatpush.bf16.msra.mxu0 %v1825
        %1998 = vmatpush.bf16.msra.mxu0 %v1822
        %1999 = vmatpush.bf16.msra.mxu0 %v1819
        %2000 = vmatpush.bf16.msra.mxu0 %v1816
        %2001 = vmatpush.bf16.msra.mxu0 %v1813
        %2002 = vmatpush.bf16.msra.mxu0 %v1810
        %2003 = vmatmul.bf16.gmra.mxu0 %v1462
        %v2004 = vpop.f32.mrf.mxu0
        %v2005 = vadd.f32 %v1564, %v2004
        %v2006 = vpop.f32.mrf.mxu0
        %v2007 = vadd.f32 %v1564, %v2006
        %2008 = vdwg.mxu0
        %2009 = vmatpush.bf16.msra.mxu0 %v1855
        %2010 = vmatpush.bf16.msra.mxu0 %v1852
        %2011 = vmatpush.bf16.msra.mxu0 %v1849
        %2012 = vmatpush.bf16.msra.mxu0 %v1846
        %2013 = vmatpush.bf16.msra.mxu0 %v1843
        %2014 = vmatpush.bf16.msra.mxu0 %v1840
        %2015 = vmatpush.bf16.msra.mxu0 %v1837
        %2016 = vmatpush.bf16.msra.mxu0 %v1834
        %2017 = vmatmul.bf16.gmra.mxu0 %v1463
        %v2018 = vpop.f32.mrf.mxu0
        %v2019 = vadd.f32 %v2005, %v2018
        %v2020 = vpop.f32.mrf.mxu0
        %v2021 = vadd.f32 %v2007, %v2020
        %2022 = vdwg.mxu0
        %2023 = vmatpush.bf16.msra.mxu0 %v1879
        %2024 = vmatpush.bf16.msra.mxu0 %v1876
        %2025 = vmatpush.bf16.msra.mxu0 %v1873
        %2026 = vmatpush.bf16.msra.mxu0 %v1870
        %2027 = vmatpush.bf16.msra.mxu0 %v1867
        %2028 = vmatpush.bf16.msra.mxu0 %v1864
        %2029 = vmatpush.bf16.msra.mxu0 %v1861
        %2030 = vmatpush.bf16.msra.mxu0 %v1858
        %2031 = vmatmul.bf16.gmra.mxu0 %v1464
        %v2032 = vpop.f32.mrf.mxu0
        %v2033 = vadd.f32 %v2019, %v2032
        %v2034 = vpop.f32.mrf.mxu0
        %v2035 = vadd.f32 %v2021, %v2034
        %2036 = vdwg.mxu0
        %2037 = vmatpush.bf16.msra.mxu0 %v1832
        %2038 = vmatpush.bf16.msra.mxu0 %v1829
        %2039 = vmatpush.bf16.msra.mxu0 %v1826
        %2040 = vmatpush.bf16.msra.mxu0 %v1823
        %2041 = vmatpush.bf16.msra.mxu0 %v1820
        %2042 = vmatpush.bf16.msra.mxu0 %v1817
        %2043 = vmatpush.bf16.msra.mxu0 %v1814
        %2044 = vmatpush.bf16.msra.mxu0 %v1811
        %2045 = vmatmul.bf16.gmra.mxu0 %v1462
        %v2046 = vpop.f32.mrf.mxu0
        %v2047 = vadd.f32 %v1565, %v2046
        %v2048 = vpop.f32.mrf.mxu0
        %v2049 = vadd.f32 %v1565, %v2048
        %2050 = vdwg.mxu0
        %2051 = vmatpush.bf16.msra.mxu0 %v1856
        %2052 = vmatpush.bf16.msra.mxu0 %v1853
        %2053 = vmatpush.bf16.msra.mxu0 %v1850
        %2054 = vmatpush.bf16.msra.mxu0 %v1847
        %2055 = vmatpush.bf16.msra.mxu0 %v1844
        %2056 = vmatpush.bf16.msra.mxu0 %v1841
        %2057 = vmatpush.bf16.msra.mxu0 %v1838
        %2058 = vmatpush.bf16.msra.mxu0 %v1835
        %2059 = vmatmul.bf16.gmra.mxu0 %v1463
        %v2060 = vpop.f32.mrf.mxu0
        %v2061 = vadd.f32 %v2047, %v2060
        %v2062 = vpop.f32.mrf.mxu0
        %v2063 = vadd.f32 %v2049, %v2062
        %2064 = vdwg.mxu0
        %2065 = vmatpush.bf16.msra.mxu0 %v1880
        %2066 = vmatpush.bf16.msra.mxu0 %v1877
        %2067 = vmatpush.bf16.msra.mxu0 %v1874
        %2068 = vmatpush.bf16.msra.mxu0 %v1871
        %2069 = vmatpush.bf16.msra.mxu0 %v1868
        %2070 = vmatpush.bf16.msra.mxu0 %v1865
        %2071 = vmatpush.bf16.msra.mxu0 %v1862
        %2072 = vmatpush.bf16.msra.mxu0 %v1859
        %2073 = vmatmul.bf16.gmra.mxu0 %v1464
        %v2074 = vpop.f32.mrf.mxu0
        %v2075 = vadd.f32 %v2061, %v2074
        %v2076 = vpop.f32.mrf.mxu0
        %v2077 = vadd.f32 %v2063, %v2076
        %2078 = vdwg.mxu0
        %p2079 = scmp.lt.s32.totalorder %s25, 6
        // Predicated region
        $region81: #{adaln_single_forward.1} parent=51 // pred_check
          %p2080 = pneg %p2079
        $region82: #{adaln_single_forward.1} parent=51 // pred_check_branch
          %2082 = sbr.rel (%p2080) target = $region84
        $region83: #{adaln_single_forward.1} parent=51 // pred_region
          %v2083 = vxor.u32 %v1991, 2147483648
          %v2084 = vxor.u32 %v2033, 2147483648
          %v2085 = vxor.u32 %v2075, 2147483648
          %v2086 = vxor.u32 %v1993, 2147483648
          %v2087 = vxor.u32 %v2035, 2147483648
          %v2088 = vxor.u32 %v2077, 2147483648
          %v2089 = vmul.f32 %v2083, 1.442695
          %v2090 = vpow.pop %v2089
          %v2091 = vmul.f32 %v2084, 1.442695
          %v2092 = vpow.pop %v2091
          %v2093 = vmul.f32 %v2085, 1.442695
          %v2094 = vpow.pop %v2093
          %v2095 = vmul.f32 %v2086, 1.442695
          %v2096 = vpow.pop %v2095
          %v2097 = vmul.f32 %v2087, 1.442695
          %v2098 = vpow.pop %v2097
          %v2099 = vmul.f32 %v2088, 1.442695
          %v2100 = vpow.pop %v2099
          %v2101 = vadd.f32 %v2090, 1.0
          %v2102 = vadd.f32 %v2092, 1.0
          %v2103 = vadd.f32 %v2094, 1.0
          %v2104 = vadd.f32 %v2096, 1.0
          %v2105 = vadd.f32 %v2098, 1.0
          %v2106 = vadd.f32 %v2100, 1.0
          %v2107 = vrcp.pop %v2101
          %v2108 = vmul.f32 %v2101, %v2107
          %v2109 = vsub.f32 1.0, %v2108
          %v2110 = vmul.f32 %v2107, %v2109
          %v2111 = vadd.f32 %v2107, %v2110
          %vm2112 = vweird.f32 %v2101
          %vm2113 = vweird.f32 %v2107
          %vm2114 = vmor %vm2112, %vm2113
          %v2115 = vsel %vm2114, %v2107, %v2111
          %v2116 = vand.u32 2147483647, %v2101
          %vm2117 = vcmp.eq.f32.partialorder %v2116, 8.507059e+37
          %v2118 = vand.u32 %v2101, 2147483648
          %v2119 = vor.u32 1.1754944e-38, %v2118
          %v2120 = vsel %vm2117, %v2119, %v2115
          %v2121 = vmul.f32 1.0, %v2120
          %v2122 = vrcp.pop %v2102
          %v2123 = vmul.f32 %v2102, %v2122
          %v2124 = vsub.f32 1.0, %v2123
          %v2125 = vmul.f32 %v2122, %v2124
          %v2126 = vadd.f32 %v2122, %v2125
          %vm2127 = vweird.f32 %v2102
          %vm2128 = vweird.f32 %v2122
          %vm2129 = vmor %vm2127, %vm2128
          %v2130 = vsel %vm2129, %v2122, %v2126
          %v2131 = vand.u32 2147483647, %v2102
          %vm2132 = vcmp.eq.f32.partialorder %v2131, 8.507059e+37
          %v2133 = vand.u32 %v2102, 2147483648
          %v2134 = vor.u32 1.1754944e-38, %v2133
          %v2135 = vsel %vm2132, %v2134, %v2130
          %v2136 = vmul.f32 1.0, %v2135
          %v2137 = vrcp.pop %v2103
          %v2138 = vmul.f32 %v2103, %v2137
          %v2139 = vsub.f32 1.0, %v2138
          %v2140 = vmul.f32 %v2137, %v2139
          %v2141 = vadd.f32 %v2137, %v2140
          %vm2142 = vweird.f32 %v2103
          %vm2143 = vweird.f32 %v2137
          %vm2144 = vmor %vm2142, %vm2143
          %v2145 = vsel %vm2144, %v2137, %v2141
          %v2146 = vand.u32 2147483647, %v2103
          %vm2147 = vcmp.eq.f32.partialorder %v2146, 8.507059e+37
          %v2148 = vand.u32 %v2103, 2147483648
          %v2149 = vor.u32 1.1754944e-38, %v2148
          %v2150 = vsel %vm2147, %v2149, %v2145
          %v2151 = vmul.f32 1.0, %v2150
          %v2152 = vrcp.pop %v2104
          %v2153 = vmul.f32 %v2104, %v2152
          %v2154 = vsub.f32 1.0, %v2153
          %v2155 = vmul.f32 %v2152, %v2154
          %v2156 = vadd.f32 %v2152, %v2155
          %vm2157 = vweird.f32 %v2104
          %vm2158 = vweird.f32 %v2152
          %vm2159 = vmor %vm2157, %vm2158
          %v2160 = vsel %vm2159, %v2152, %v2156
          %v2161 = vand.u32 2147483647, %v2104
          %vm2162 = vcmp.eq.f32.partialorder %v2161, 8.507059e+37
          %v2163 = vand.u32 %v2104, 2147483648
          %v2164 = vor.u32 1.1754944e-38, %v2163
          %v2165 = vsel %vm2162, %v2164, %v2160
          %v2166 = vmul.f32 1.0, %v2165
          %v2167 = vrcp.pop %v2105
          %v2168 = vmul.f32 %v2105, %v2167
          %v2169 = vsub.f32 1.0, %v2168
          %v2170 = vmul.f32 %v2167, %v2169
          %v2171 = vadd.f32 %v2167, %v2170
          %vm2172 = vweird.f32 %v2105
          %vm2173 = vweird.f32 %v2167
          %vm2174 = vmor %vm2172, %vm2173
          %v2175 = vsel %vm2174, %v2167, %v2171
          %v2176 = vand.u32 2147483647, %v2105
          %vm2177 = vcmp.eq.f32.partialorder %v2176, 8.507059e+37
          %v2178 = vand.u32 %v2105, 2147483648
          %v2179 = vor.u32 1.1754944e-38, %v2178
          %v2180 = vsel %vm2177, %v2179, %v2175
          %v2181 = vmul.f32 1.0, %v2180
          %v2182 = vrcp.pop %v2106
          %v2183 = vmul.f32 %v2106, %v2182
          %v2184 = vsub.f32 1.0, %v2183
          %v2185 = vmul.f32 %v2182, %v2184
          %v2186 = vadd.f32 %v2182, %v2185
          %vm2187 = vweird.f32 %v2106
          %vm2188 = vweird.f32 %v2182
          %vm2189 = vmor %vm2187, %vm2188
          %v2190 = vsel %vm2189, %v2182, %v2186
          %v2191 = vand.u32 2147483647, %v2106
          %vm2192 = vcmp.eq.f32.partialorder %v2191, 8.507059e+37
          %v2193 = vand.u32 %v2106, 2147483648
          %v2194 = vor.u32 1.1754944e-38, %v2193
          %v2195 = vsel %vm2192, %v2194, %v2190
          %v2196 = vmul.f32 1.0, %v2195
          %v2197 = vmul.f32 %v1991, %v2121
          %v2198 = vmul.f32 %v2033, %v2136
          %v2199 = vmul.f32 %v2075, %v2151
          %v2200 = vmul.f32 %v1993, %v2166
          %v2201 = vmul.f32 %v2035, %v2181
          %v2202 = vmul.f32 %v2077, %v2196
          %v2203 = vpack.c.bf16 %v2200, %v2197
          %v2204 = vpack.c.bf16 %v2201, %v2198
          %v2205 = vpack.c.bf16 %v2202, %v2199
          %v2206 = vld [vmem:[%s401] sm:$0xff]
          %v2207 = vld [vmem:[%s401 + $0x8] sm:$0xf]
          %v2208 = vld [vmem:[%s401 + $0xc] sm:$0xff]
          %v2209 = vld [vmem:[%s401 + $0x14] sm:$0xf]
          %v2210 = vld [vmem:[%s401 + $0x18] sm:$0xff]
          %v2211 = vld [vmem:[%s401 + $0x20] sm:$0xf]
          %v2212 = vld [vmem:[%s401 + $0x24] sm:$0xff]
          %v2213 = vld [vmem:[%s401 + $0x2c] sm:$0xf]
          %v2214 = vld [vmem:[%s401 + $0x30] sm:$0xff]
          %v2215 = vld [vmem:[%s401 + $0x38] sm:$0xf]
          %v2216 = vld [vmem:[%s401 + $0x3c] sm:$0xff]
          %v2217 = vld [vmem:[%s401 + $0x44] sm:$0xf]
          %v2218 = vld [vmem:[%s401 + $0x48] sm:$0xff]
          %v2219 = vld [vmem:[%s401 + $0x50] sm:$0xf]
          %v2220 = vld [vmem:[%s401 + $0x54] sm:$0xff]
          %v2221 = vld [vmem:[%s401 + $0x5c] sm:$0xf]
          %v2222 = vld [vmem:[%s401 + $0x60] sm:$0xff]
          %v2223 = vld [vmem:[%s401 + $0x68] sm:$0xf]
          %v2224 = vld [vmem:[%s401 + $0x6c] sm:$0xff]
          %v2225 = vld [vmem:[%s401 + $0x74] sm:$0xf]
          %v2226 = vld [vmem:[%s401 + $0x78] sm:$0xff]
          %v2227 = vld [vmem:[%s401 + $0x80] sm:$0xf]
          %v2228 = vld [vmem:[%s401 + $0x84] sm:$0xff]
          %v2229 = vld [vmem:[%s401 + $0x8c] sm:$0xf]
          %v2230 = vld [vmem:[%s401 + $0x90] sm:$0xff]
          %v2231 = vld [vmem:[%s401 + $0x98] sm:$0xf]
          %v2232 = vld [vmem:[%s401 + $0x9c] sm:$0xff]
          %v2233 = vld [vmem:[%s401 + $0xa4] sm:$0xf]
          %v2234 = vld [vmem:[%s401 + $0xa8] sm:$0xff]
          %v2235 = vld [vmem:[%s401 + $0xb0] sm:$0xf]
          %v2236 = vld [vmem:[%s401 + $0xb4] sm:$0xff]
          %v2237 = vld [vmem:[%s401 + $0xbc] sm:$0xf]
          %v2238 = vld [vmem:[%s401 + $0xc0] sm:$0xff]
          %v2239 = vld [vmem:[%s401 + $0xc8] sm:$0xf]
          %v2240 = vld [vmem:[%s401 + $0xcc] sm:$0xff]
          %v2241 = vld [vmem:[%s401 + $0xd4] sm:$0xf]
          %v2242 = vld [vmem:[%s401 + $0xd8] sm:$0xff]
          %v2243 = vld [vmem:[%s401 + $0xe0] sm:$0xf]
          %v2244 = vld [vmem:[%s401 + $0xe4] sm:$0xff]
          %v2245 = vld [vmem:[%s401 + $0xec] sm:$0xf]
          %v2246 = vld [vmem:[%s401 + $0xf0] sm:$0xff]
          %v2247 = vld [vmem:[%s401 + $0xf8] sm:$0xf]
          %v2248 = vld [vmem:[%s401 + $0xfc] sm:$0xff]
          %v2249 = vld [vmem:[%s401 + $0x104] sm:$0xf]
          %v2250 = vld [vmem:[%s401 + $0x108] sm:$0xff]
          %v2251 = vld [vmem:[%s401 + $0x110] sm:$0xf]
          %v2252 = vld [vmem:[%s401 + $0x114] sm:$0xff]
          %v2253 = vld [vmem:[%s401 + $0x11c] sm:$0xf]
          %v2254 = vld [vmem:[%s401 + $0x120] sm:$0xff]
          %v2255 = vld [vmem:[%s401 + $0x128] sm:$0xf]
          %v2256 = vld [vmem:[%s401 + $0x12c] sm:$0xff]
          %v2257 = vld [vmem:[%s401 + $0x134] sm:$0xf]
          %v2258 = vld [vmem:[%s401 + $0x138] sm:$0xff]
          %v2259 = vld [vmem:[%s401 + $0x140] sm:$0xf]
          %v2260 = vld [vmem:[%s401 + $0x144] sm:$0xff]
          %v2261 = vld [vmem:[%s401 + $0x14c] sm:$0xf]
          %v2262 = vld [vmem:[%s401 + $0x150] sm:$0xff]
          %v2263 = vld [vmem:[%s401 + $0x158] sm:$0xf]
          %v2264 = vld [vmem:[%s401 + $0x15c] sm:$0xff]
          %v2265 = vld [vmem:[%s401 + $0x164] sm:$0xf]
          %v2266 = vld [vmem:[%s401 + $0x168] sm:$0xff]
          %v2267 = vld [vmem:[%s401 + $0x170] sm:$0xf]
          %v2268 = vld [vmem:[%s401 + $0x174] sm:$0xff]
          %v2269 = vld [vmem:[%s401 + $0x17c] sm:$0xf]
          %v2270 = vld [vmem:[%s401 + $0x180] sm:$0xff]
          %v2271 = vld [vmem:[%s401 + $0x188] sm:$0xf]
          %v2272 = vld [vmem:[%s401 + $0x18c] sm:$0xff]
          %v2273 = vld [vmem:[%s401 + $0x194] sm:$0xf]
          %v2274 = vld [vmem:[%s401 + $0x198] sm:$0xff]
          %v2275 = vld [vmem:[%s401 + $0x1a0] sm:$0xf]
          %v2276 = vld [vmem:[%s401 + $0x1a4] sm:$0xff]
          %v2277 = vld [vmem:[%s401 + $0x1ac] sm:$0xf]
          %v2278 = vld [vmem:[%s401 + $0x1b0] sm:$0xff]
          %v2279 = vld [vmem:[%s401 + $0x1b8] sm:$0xf]
          %v2280 = vld [vmem:[%s401 + $0x1bc] sm:$0xff]
          %v2281 = vld [vmem:[%s401 + $0x1c4] sm:$0xf]
          %v2282 = vld [vmem:[%s401 + $0x1c8] sm:$0xff]
          %v2283 = vld [vmem:[%s401 + $0x1d0] sm:$0xf]
          %v2284 = vld [vmem:[%s401 + $0x1d4] sm:$0xff]
          %v2285 = vld [vmem:[%s401 + $0x1dc] sm:$0xf]
          %v2286 = vld [vmem:[%s401 + $0x1e0] sm:$0xff]
          %v2287 = vld [vmem:[%s401 + $0x1e8] sm:$0xf]
          %v2288 = vld [vmem:[%s401 + $0x1ec] sm:$0xff]
          %v2289 = vld [vmem:[%s401 + $0x1f4] sm:$0xf]
          %v2290 = vld [vmem:[%s401 + $0x1f8] sm:$0xff]
          %v2291 = vld [vmem:[%s401 + $0x200] sm:$0xf]
          %v2292 = vld [vmem:[%s401 + $0x204] sm:$0xff]
          %v2293 = vld [vmem:[%s401 + $0x20c] sm:$0xf]
          %v2294 = vld [vmem:[%s401 + $0x210] sm:$0xff]
          %v2295 = vld [vmem:[%s401 + $0x218] sm:$0xf]
          %v2296 = vld [vmem:[%s401 + $0x21c] sm:$0xff]
          %v2297 = vld [vmem:[%s401 + $0x224] sm:$0xf]
          %v2298 = vld [vmem:[%s401 + $0x228] sm:$0xff]
          %v2299 = vld [vmem:[%s401 + $0x230] sm:$0xf]
          %v2300 = vld [vmem:[%s401 + $0x234] sm:$0xff]
          %v2301 = vld [vmem:[%s401 + $0x23c] sm:$0xf]
          %v2302 = vld [vmem:[%s411] sm:$0x7]
          %v2304 = vperm.slane %v2302, 0
          %v2305 = vperm.slane %v2302, 1
          %v2306 = vperm.slane %v2302, 2
          %v2406 = vunpack.c.l.b16 %v2206
          %v2407 = vunpack.c.h.b16 %v2206
          %v2408 = vunpack.c.l.b16 %v2207
          %v2409 = vunpack.c.l.b16 %v2208
          %v2410 = vunpack.c.h.b16 %v2208
          %v2411 = vunpack.c.l.b16 %v2209
          %v2412 = vunpack.c.l.b16 %v2210
          %v2413 = vunpack.c.h.b16 %v2210
          %v2414 = vunpack.c.l.b16 %v2211
          %v2415 = vunpack.c.l.b16 %v2212
          %v2416 = vunpack.c.h.b16 %v2212
          %v2417 = vunpack.c.l.b16 %v2213
          %v2418 = vunpack.c.l.b16 %v2214
          %v2419 = vunpack.c.h.b16 %v2214
          %v2420 = vunpack.c.l.b16 %v2215
          %v2421 = vunpack.c.l.b16 %v2216
          %v2422 = vunpack.c.h.b16 %v2216
          %v2423 = vunpack.c.l.b16 %v2217
          %v2424 = vunpack.c.l.b16 %v2218
          %v2425 = vunpack.c.h.b16 %v2218
          %v2426 = vunpack.c.l.b16 %v2219
          %v2427 = vunpack.c.l.b16 %v2220
          %v2428 = vunpack.c.h.b16 %v2220
          %v2429 = vunpack.c.l.b16 %v2221
          %v2430 = vunpack.c.l.b16 %v2222
          %v2431 = vunpack.c.h.b16 %v2222
          %v2432 = vunpack.c.l.b16 %v2223
          %v2433 = vunpack.c.l.b16 %v2224
          %v2434 = vunpack.c.h.b16 %v2224
          %v2435 = vunpack.c.l.b16 %v2225
          %v2436 = vunpack.c.l.b16 %v2226
          %v2437 = vunpack.c.h.b16 %v2226
          %v2438 = vunpack.c.l.b16 %v2227
          %v2439 = vunpack.c.l.b16 %v2228
          %v2440 = vunpack.c.h.b16 %v2228
          %v2441 = vunpack.c.l.b16 %v2229
          %v2442 = vunpack.c.l.b16 %v2230
          %v2443 = vunpack.c.h.b16 %v2230
          %v2444 = vunpack.c.l.b16 %v2231
          %v2445 = vunpack.c.l.b16 %v2232
          %v2446 = vunpack.c.h.b16 %v2232
          %v2447 = vunpack.c.l.b16 %v2233
          %v2448 = vunpack.c.l.b16 %v2234
          %v2449 = vunpack.c.h.b16 %v2234
          %v2450 = vunpack.c.l.b16 %v2235
          %v2451 = vunpack.c.l.b16 %v2236
          %v2452 = vunpack.c.h.b16 %v2236
          %v2453 = vunpack.c.l.b16 %v2237
          %v2454 = vunpack.c.l.b16 %v2238
          %v2455 = vunpack.c.h.b16 %v2238
          %v2456 = vunpack.c.l.b16 %v2239
          %v2457 = vunpack.c.l.b16 %v2240
          %v2458 = vunpack.c.h.b16 %v2240
          %v2459 = vunpack.c.l.b16 %v2241
          %v2460 = vunpack.c.l.b16 %v2242
          %v2461 = vunpack.c.h.b16 %v2242
          %v2462 = vunpack.c.l.b16 %v2243
          %v2463 = vunpack.c.l.b16 %v2244
          %v2464 = vunpack.c.h.b16 %v2244
          %v2465 = vunpack.c.l.b16 %v2245
          %v2466 = vunpack.c.l.b16 %v2246
          %v2467 = vunpack.c.h.b16 %v2246
          %v2468 = vunpack.c.l.b16 %v2247
          %v2469 = vunpack.c.l.b16 %v2248
          %v2470 = vunpack.c.h.b16 %v2248
          %v2471 = vunpack.c.l.b16 %v2249
          %v2472 = vunpack.c.l.b16 %v2250
          %v2473 = vunpack.c.h.b16 %v2250
          %v2474 = vunpack.c.l.b16 %v2251
          %v2475 = vunpack.c.l.b16 %v2252
          %v2476 = vunpack.c.h.b16 %v2252
          %v2477 = vunpack.c.l.b16 %v2253
          %v2478 = vunpack.c.l.b16 %v2254
          %v2479 = vunpack.c.h.b16 %v2254
          %v2480 = vunpack.c.l.b16 %v2255
          %v2481 = vunpack.c.l.b16 %v2256
          %v2482 = vunpack.c.h.b16 %v2256
          %v2483 = vunpack.c.l.b16 %v2257
          %v2484 = vunpack.c.l.b16 %v2258
          %v2485 = vunpack.c.h.b16 %v2258
          %v2486 = vunpack.c.l.b16 %v2259
          %v2487 = vunpack.c.l.b16 %v2260
          %v2488 = vunpack.c.h.b16 %v2260
          %v2489 = vunpack.c.l.b16 %v2261
          %v2490 = vunpack.c.l.b16 %v2262
          %v2491 = vunpack.c.h.b16 %v2262
          %v2492 = vunpack.c.l.b16 %v2263
          %v2493 = vunpack.c.l.b16 %v2264
          %v2494 = vunpack.c.h.b16 %v2264
          %v2495 = vunpack.c.l.b16 %v2265
          %v2496 = vunpack.c.l.b16 %v2266
          %v2497 = vunpack.c.h.b16 %v2266
          %v2498 = vunpack.c.l.b16 %v2267
          %v2499 = vunpack.c.l.b16 %v2268
          %v2500 = vunpack.c.h.b16 %v2268
          %v2501 = vunpack.c.l.b16 %v2269
          %v2502 = vunpack.c.l.b16 %v2270
          %v2503 = vunpack.c.h.b16 %v2270
          %v2504 = vunpack.c.l.b16 %v2271
          %v2505 = vunpack.c.l.b16 %v2272
          %v2506 = vunpack.c.h.b16 %v2272
          %v2507 = vunpack.c.l.b16 %v2273
          %v2508 = vunpack.c.l.b16 %v2274
          %v2509 = vunpack.c.h.b16 %v2274
          %v2510 = vunpack.c.l.b16 %v2275
          %v2511 = vunpack.c.l.b16 %v2276
          %v2512 = vunpack.c.h.b16 %v2276
          %v2513 = vunpack.c.l.b16 %v2277
          %v2514 = vunpack.c.l.b16 %v2278
          %v2515 = vunpack.c.h.b16 %v2278
          %v2516 = vunpack.c.l.b16 %v2279
          %v2517 = vunpack.c.l.b16 %v2280
          %v2518 = vunpack.c.h.b16 %v2280
          %v2519 = vunpack.c.l.b16 %v2281
          %v2520 = vunpack.c.l.b16 %v2282
          %v2521 = vunpack.c.h.b16 %v2282
          %v2522 = vunpack.c.l.b16 %v2283
          %v2523 = vunpack.c.l.b16 %v2284
          %v2524 = vunpack.c.h.b16 %v2284
          %v2525 = vunpack.c.l.b16 %v2285
          %v2526 = vunpack.c.l.b16 %v2286
          %v2527 = vunpack.c.h.b16 %v2286
          %v2528 = vunpack.c.l.b16 %v2287
          %v2529 = vunpack.c.l.b16 %v2288
          %v2530 = vunpack.c.h.b16 %v2288
          %v2531 = vunpack.c.l.b16 %v2289
          %v2532 = vunpack.c.l.b16 %v2290
          %v2533 = vunpack.c.h.b16 %v2290
          %v2534 = vunpack.c.l.b16 %v2291
          %v2535 = vunpack.c.l.b16 %v2292
          %v2536 = vunpack.c.h.b16 %v2292
          %v2537 = vunpack.c.l.b16 %v2293
          %v2538 = vunpack.c.l.b16 %v2294
          %v2539 = vunpack.c.h.b16 %v2294
          %v2540 = vunpack.c.l.b16 %v2295
          %v2541 = vunpack.c.l.b16 %v2296
          %v2542 = vunpack.c.h.b16 %v2296
          %v2543 = vunpack.c.l.b16 %v2297
          %v2544 = vunpack.c.l.b16 %v2298
          %v2545 = vunpack.c.h.b16 %v2298
          %v2546 = vunpack.c.l.b16 %v2299
          %v2547 = vunpack.c.l.b16 %v2300
          %v2548 = vunpack.c.h.b16 %v2300
          %v2549 = vunpack.c.l.b16 %v2301
          %v2550 = vpack.c.b16 %v2409, %v2406
          %v2551 = vpack.c.b16 %v2410, %v2407
          %v2552 = vpack.c.b16 %v2411, %v2408
          %v2553 = vpack.c.b16 %v2415, %v2412
          %v2554 = vpack.c.b16 %v2416, %v2413
          %v2555 = vpack.c.b16 %v2417, %v2414
          %v2556 = vpack.c.b16 %v2421, %v2418
          %v2557 = vpack.c.b16 %v2422, %v2419
          %v2558 = vpack.c.b16 %v2423, %v2420
          %v2559 = vpack.c.b16 %v2427, %v2424
          %v2560 = vpack.c.b16 %v2428, %v2425
          %v2561 = vpack.c.b16 %v2429, %v2426
          %v2562 = vpack.c.b16 %v2433, %v2430
          %v2563 = vpack.c.b16 %v2434, %v2431
          %v2564 = vpack.c.b16 %v2435, %v2432
          %v2565 = vpack.c.b16 %v2439, %v2436
          %v2566 = vpack.c.b16 %v2440, %v2437
          %v2567 = vpack.c.b16 %v2441, %v2438
          %v2568 = vpack.c.b16 %v2445, %v2442
          %v2569 = vpack.c.b16 %v2446, %v2443
          %v2570 = vpack.c.b16 %v2447, %v2444
          %v2571 = vpack.c.b16 %v2451, %v2448
          %v2572 = vpack.c.b16 %v2452, %v2449
          %v2573 = vpack.c.b16 %v2453, %v2450
          %v2574 = vpack.c.b16 %v2457, %v2454
          %v2575 = vpack.c.b16 %v2458, %v2455
          %v2576 = vpack.c.b16 %v2459, %v2456
          %v2577 = vpack.c.b16 %v2463, %v2460
          %v2578 = vpack.c.b16 %v2464, %v2461
          %v2579 = vpack.c.b16 %v2465, %v2462
          %v2580 = vpack.c.b16 %v2469, %v2466
          %v2581 = vpack.c.b16 %v2470, %v2467
          %v2582 = vpack.c.b16 %v2471, %v2468
          %v2583 = vpack.c.b16 %v2475, %v2472
          %v2584 = vpack.c.b16 %v2476, %v2473
          %v2585 = vpack.c.b16 %v2477, %v2474
          %v2586 = vpack.c.b16 %v2481, %v2478
          %v2587 = vpack.c.b16 %v2482, %v2479
          %v2588 = vpack.c.b16 %v2483, %v2480
          %v2589 = vpack.c.b16 %v2487, %v2484
          %v2590 = vpack.c.b16 %v2488, %v2485
          %v2591 = vpack.c.b16 %v2489, %v2486
          %v2592 = vpack.c.b16 %v2493, %v2490
          %v2593 = vpack.c.b16 %v2494, %v2491
          %v2594 = vpack.c.b16 %v2495, %v2492
          %v2595 = vpack.c.b16 %v2499, %v2496
          %v2596 = vpack.c.b16 %v2500, %v2497
          %v2597 = vpack.c.b16 %v2501, %v2498
          %v2598 = vpack.c.b16 %v2505, %v2502
          %v2599 = vpack.c.b16 %v2506, %v2503
          %v2600 = vpack.c.b16 %v2507, %v2504
          %v2601 = vpack.c.b16 %v2511, %v2508
          %v2602 = vpack.c.b16 %v2512, %v2509
          %v2603 = vpack.c.b16 %v2513, %v2510
          %v2604 = vpack.c.b16 %v2517, %v2514
          %v2605 = vpack.c.b16 %v2518, %v2515
          %v2606 = vpack.c.b16 %v2519, %v2516
          %v2607 = vpack.c.b16 %v2523, %v2520
          %v2608 = vpack.c.b16 %v2524, %v2521
          %v2609 = vpack.c.b16 %v2525, %v2522
          %v2610 = vpack.c.b16 %v2529, %v2526
          %v2611 = vpack.c.b16 %v2530, %v2527
          %v2612 = vpack.c.b16 %v2531, %v2528
          %v2613 = vpack.c.b16 %v2535, %v2532
          %v2614 = vpack.c.b16 %v2536, %v2533
          %v2615 = vpack.c.b16 %v2537, %v2534
          %v2616 = vpack.c.b16 %v2541, %v2538
          %v2617 = vpack.c.b16 %v2542, %v2539
          %v2618 = vpack.c.b16 %v2543, %v2540
          %v2619 = vpack.c.b16 %v2547, %v2544
          %v2620 = vpack.c.b16 %v2548, %v2545
          %v2621 = vpack.c.b16 %v2549, %v2546
          %2694 = vmatpush.bf16.msra.mxu0 %v2571
          %2695 = vmatpush.bf16.msra.mxu0 %v2568
          %2696 = vmatpush.bf16.msra.mxu0 %v2565
          %2697 = vmatpush.bf16.msra.mxu0 %v2562
          %2698 = vmatpush.bf16.msra.mxu0 %v2559
          %2699 = vmatpush.bf16.msra.mxu0 %v2556
          %2700 = vmatpush.bf16.msra.mxu0 %v2553
          %2701 = vmatpush.bf16.msra.mxu0 %v2550
          %2702 = vmatmul.bf16.gmra.mxu0 %v2203
          %v2703 = vpop.f32.mrf.mxu0
          %v2704 = vadd.f32 %v2304, %v2703
          %v2705 = vpop.f32.mrf.mxu0
          %v2706 = vadd.f32 %v2304, %v2705
          %2707 = vdwg.mxu0
          %2708 = vmatpush.bf16.msra.mxu0 %v2595
          %2709 = vmatpush.bf16.msra.mxu0 %v2592
          %2710 = vmatpush.bf16.msra.mxu0 %v2589
          %2711 = vmatpush.bf16.msra.mxu0 %v2586
          %2712 = vmatpush.bf16.msra.mxu0 %v2583
          %2713 = vmatpush.bf16.msra.mxu0 %v2580
          %2714 = vmatpush.bf16.msra.mxu0 %v2577
          %2715 = vmatpush.bf16.msra.mxu0 %v2574
          %2716 = vmatmul.bf16.gmra.mxu0 %v2204
          %v2717 = vpop.f32.mrf.mxu0
          %v2718 = vadd.f32 %v2704, %v2717
          %v2719 = vpop.f32.mrf.mxu0
          %v2720 = vadd.f32 %v2706, %v2719
          %2721 = vdwg.mxu0
          %2722 = vmatpush.bf16.msra.mxu0 %v2619
          %2723 = vmatpush.bf16.msra.mxu0 %v2616
          %2724 = vmatpush.bf16.msra.mxu0 %v2613
          %2725 = vmatpush.bf16.msra.mxu0 %v2610
          %2726 = vmatpush.bf16.msra.mxu0 %v2607
          %2727 = vmatpush.bf16.msra.mxu0 %v2604
          %2728 = vmatpush.bf16.msra.mxu0 %v2601
          %2729 = vmatpush.bf16.msra.mxu0 %v2598
          %2730 = vmatmul.bf16.gmra.mxu0 %v2205
          %v2731 = vpop.f32.mrf.mxu0
          %v2732 = vadd.f32 %v2718, %v2731
          %v2733 = vpop.f32.mrf.mxu0
          %v2734 = vadd.f32 %v2720, %v2733
          %2735 = vdwg.mxu0
          %2736 = vmatpush.bf16.msra.mxu0 %v2572
          %2737 = vmatpush.bf16.msra.mxu0 %v2569
          %2738 = vmatpush.bf16.msra.mxu0 %v2566
          %2739 = vmatpush.bf16.msra.mxu0 %v2563
          %2740 = vmatpush.bf16.msra.mxu0 %v2560
          %2741 = vmatpush.bf16.msra.mxu0 %v2557
          %2742 = vmatpush.bf16.msra.mxu0 %v2554
          %2743 = vmatpush.bf16.msra.mxu0 %v2551
          %2744 = vmatmul.bf16.gmra.mxu0 %v2203
          %v2745 = vpop.f32.mrf.mxu0
          %v2746 = vadd.f32 %v2305, %v2745
          %v2747 = vpop.f32.mrf.mxu0
          %v2748 = vadd.f32 %v2305, %v2747
          %2749 = vdwg.mxu0
          %2750 = vmatpush.bf16.msra.mxu0 %v2596
          %2751 = vmatpush.bf16.msra.mxu0 %v2593
          %2752 = vmatpush.bf16.msra.mxu0 %v2590
          %2753 = vmatpush.bf16.msra.mxu0 %v2587
          %2754 = vmatpush.bf16.msra.mxu0 %v2584
          %2755 = vmatpush.bf16.msra.mxu0 %v2581
          %2756 = vmatpush.bf16.msra.mxu0 %v2578
          %2757 = vmatpush.bf16.msra.mxu0 %v2575
          %2758 = vmatmul.bf16.gmra.mxu0 %v2204
          %v2759 = vpop.f32.mrf.mxu0
          %v2760 = vadd.f32 %v2746, %v2759
          %v2761 = vpop.f32.mrf.mxu0
          %v2762 = vadd.f32 %v2748, %v2761
          %2763 = vdwg.mxu0
          %2764 = vmatpush.bf16.msra.mxu0 %v2620
          %2765 = vmatpush.bf16.msra.mxu0 %v2617
          %2766 = vmatpush.bf16.msra.mxu0 %v2614
          %2767 = vmatpush.bf16.msra.mxu0 %v2611
          %2768 = vmatpush.bf16.msra.mxu0 %v2608
          %2769 = vmatpush.bf16.msra.mxu0 %v2605
          %2770 = vmatpush.bf16.msra.mxu0 %v2602
          %2771 = vmatpush.bf16.msra.mxu0 %v2599
          %2772 = vmatmul.bf16.gmra.mxu0 %v2205
          %v2773 = vpop.f32.mrf.mxu0
          %v2774 = vadd.f32 %v2760, %v2773
          %v2775 = vpop.f32.mrf.mxu0
          %v2776 = vadd.f32 %v2762, %v2775
          %2777 = vdwg.mxu0
          %2778 = vmatpush.bf16.msra.mxu0 %v2573
          %2779 = vmatpush.bf16.msra.mxu0 %v2570
          %2780 = vmatpush.bf16.msra.mxu0 %v2567
          %2781 = vmatpush.bf16.msra.mxu0 %v2564
          %2782 = vmatpush.bf16.msra.mxu0 %v2561
          %2783 = vmatpush.bf16.msra.mxu0 %v2558
          %2784 = vmatpush.bf16.msra.mxu0 %v2555
          %2785 = vmatpush.bf16.msra.mxu0 %v2552
          %2786 = vmatmul.bf16.gmra.mxu0 %v2203
          %v2787 = vpop.f32.mrf.mxu0
          %v2788 = vadd.f32 %v2306, %v2787
          %v2789 = vpop.f32.mrf.mxu0
          %v2790 = vadd.f32 %v2306, %v2789
          %2791 = vdwg.mxu0
          %2792 = vmatpush.bf16.msra.mxu0 %v2597
          %2793 = vmatpush.bf16.msra.mxu0 %v2594
          %2794 = vmatpush.bf16.msra.mxu0 %v2591
          %2795 = vmatpush.bf16.msra.mxu0 %v2588
          %2796 = vmatpush.bf16.msra.mxu0 %v2585
          %2797 = vmatpush.bf16.msra.mxu0 %v2582
          %2798 = vmatpush.bf16.msra.mxu0 %v2579
          %2799 = vmatpush.bf16.msra.mxu0 %v2576
          %2800 = vmatmul.bf16.gmra.mxu0 %v2204
          %v2801 = vpop.f32.mrf.mxu0
          %v2802 = vadd.f32 %v2788, %v2801
          %v2803 = vpop.f32.mrf.mxu0
          %v2804 = vadd.f32 %v2790, %v2803
          %2805 = vdwg.mxu0
          %2806 = vmatpush.bf16.msra.mxu0 %v2621
          %2807 = vmatpush.bf16.msra.mxu0 %v2618
          %2808 = vmatpush.bf16.msra.mxu0 %v2615
          %2809 = vmatpush.bf16.msra.mxu0 %v2612
          %2810 = vmatpush.bf16.msra.mxu0 %v2609
          %2811 = vmatpush.bf16.msra.mxu0 %v2606
          %2812 = vmatpush.bf16.msra.mxu0 %v2603
          %2813 = vmatpush.bf16.msra.mxu0 %v2600
          %2814 = vmatmul.bf16.gmra.mxu0 %v2205
          %v2815 = vpop.f32.mrf.mxu0
          %v2816 = vadd.f32 %v2802, %v2815
          %v2817 = vpop.f32.mrf.mxu0
          %v2818 = vadd.f32 %v2804, %v2817
          %2819 = vdwg.mxu0
          %2820 = vst [vmem:[%s448] sm:$0xff] %v2732
          %2821 = vst [vmem:[%s448 + $0x8] sm:$0xff] %v2774
          %2822 = vst [vmem:[%s448 + $0x10] sm:$0xff] %v2816
          %2823 = vst [vmem:[%s448 + $0x18] sm:$0xff] %v2734
          %2824 = vst [vmem:[%s448 + $0x20] sm:$0xff] %v2776
          %2825 = vst [vmem:[%s448 + $0x28] sm:$0xff] %v2818
        $region84: #{adaln_single_forward.1} parent=51 // pred_fallthru
          _
        %p2826 = scmp.eq.s32.totalorder %s25, 6
        // Predicated region
        $region85: #{adaln_single_forward.1} parent=51 // pred_check
          %p2827 = pneg %p2826
        $region86: #{adaln_single_forward.1} parent=51 // pred_check_branch
          %2829 = sbr.rel (%p2827) target = $region88
        $region87: #{adaln_single_forward.1} parent=51 // pred_region
          %2830 = vst [vmem:[%s448] sm:$0xff] %v1991
          %2831 = vst [vmem:[%s448 + $0x8] sm:$0xff] %v2033
          %2832 = vst [vmem:[%s448 + $0x10] sm:$0xff] %v2075
          %2833 = vst [vmem:[%s448 + $0x18] sm:$0xff] %v1993
          %2834 = vst [vmem:[%s448 + $0x20] sm:$0xff] %v2035
          %2835 = vst [vmem:[%s448 + $0x28] sm:$0xff] %v2077
        $region88: #{adaln_single_forward.1} parent=51 // pred_fallthru
          _
        %s2836 = sand.u32 %s219, 1
        %s2837 = sand.u32 %s219, 1
        %s2838 = smul.addr %s2837, 48
        %s2839 = scalar_lea.vmem [#allocation13], %s2838
        // Predicated region
        $region89: #{adaln_single_forward.1} parent=51 // pred_check
          %p2840 = pneg %p229
        $region90: #{adaln_single_forward.1} parent=51 // pred_check_branch
          %2842 = sbr.rel (%p2840) target = $region92
        $region91: #{adaln_single_forward.1} parent=51 // pred_region
          %s2843 = smul.u32 3, %s25
          %s2844 = smul.addr %s2843, 8
          %s2845 = scalar_lea.vmem %s8, %s2844
          // Predicated region
          $region93: #{adaln_single_forward.1} parent=91 // pred_check
            _
          $region94: #{adaln_single_forward.1} parent=91 // pred_check_branch
            %2847 = sbr.rel (0) target = $region96
          $region95: #{adaln_single_forward.1} parent=91 // pred_region
            // Predicated region
            $region97: #{adaln_single_forward.1} parent=95 // pred_check
              _
            $region98: #{adaln_single_forward.1} parent=95 // pred_check_branch
              %2849 = sbr.rel (0) target = $region100
            $region99: #{adaln_single_forward.1} parent=95 // pred_region
              loop: start=0, step=1, limit=1
              $region101: #{adaln_single_forward.1} parent=99 // loop_pre_header
                _
              $region102: #{adaln_single_forward.1} parent=99 // loop_header
                %s2851 = sphi 0, %s2855
                %p2852 = scmp.ge.s32.totalorder %s2851, 1
                %s2856 = sphi %s2839, %s2839
                %s2857 = sphi %s2845, %s2845
              $region103: #{adaln_single_forward.1} parent=99 // loop_header_branch
                %2854 = sbr.rel (%p2852) target = $region107
              $region104: #{adaln_single_forward.1} parent=99 // loop_body
                %v2858 = vld [vmem:[%s2856] sm:$0xff]
                %2859 = vst [vmem:[%s2857] sm:$0xff] %v2858
                %v2860 = vld [vmem:[%s2856 + $0x8] sm:$0xff]
                %2861 = vst [vmem:[%s2857 + $0x8] sm:$0xff] %v2860
                %v2862 = vld [vmem:[%s2856 + $0x10] sm:$0xff]
                %2863 = vst [vmem:[%s2857 + $0x10] sm:$0xff] %v2862
                %v2864 = vld [vmem:[%s2856 + $0x18] sm:$0xff]
                %2865 = vst [vmem:[%s2857 + $0xa8] sm:$0xff] %v2864
                %v2866 = vld [vmem:[%s2856 + $0x20] sm:$0xff]
                %2867 = vst [vmem:[%s2857 + $0xb0] sm:$0xff] %v2866
                %v2868 = vld [vmem:[%s2856 + $0x28] sm:$0xff]
                %2869 = vst [vmem:[%s2857 + $0xb8] sm:$0xff] %v2868
              $region105: #{adaln_single_forward.1} parent=99 // loop_footer
                %s2855 = sadd.s32 1, %s2851
              $region106: #{adaln_single_forward.1} parent=99 // loop_footer_branch
                %2850 = sbr.rel target = $region102
              $region107: #{adaln_single_forward.1} parent=99 // loop_exit
                _
            $region100: #{adaln_single_forward.1} parent=95 // pred_fallthru
              _
            // Predicated region
            $region108: #{adaln_single_forward.1} parent=95 // pred_check
              _
            $region109: #{adaln_single_forward.1} parent=95 // pred_check_branch
              %2871 = sbr.rel target = $region111
            $region110: #{adaln_single_forward.1} parent=95 // pred_region
              _
            $region111: #{adaln_single_forward.1} parent=95 // pred_fallthru
              _
          $region96: #{adaln_single_forward.1} parent=91 // pred_fallthru
            _
          %2872 = vnop
        $region92: #{adaln_single_forward.1} parent=51 // pred_fallthru
          _
      $region52: #{adaln_single_forward.1} parent=5 // pred_fallthru
        _
      %p2873 = scmp.le.s32.totalorder 2, %s20
      // Predicated region
      $region112: #{adaln_single_forward.1} parent=5 // pred_check
        %p2874 = pneg %p2873
      $region113: #{adaln_single_forward.1} parent=5 // pred_check_branch
        %2876 = sbr.rel (%p2874) target = $region115
      $region114: #{adaln_single_forward.1} parent=5 // pred_region
        %s2877 = ssub.s32 %s20, 2
        // Predicated region
        $region116: #{adaln_single_forward.1} parent=114 // pred_check
          %p2878 = pneg %p235
        $region117: #{adaln_single_forward.1} parent=114 // pred_check_branch
          %2880 = sbr.rel (%p2878) target = $region119
        $region118: #{adaln_single_forward.1} parent=114 // pred_region
          %s2881 = sand.u32 %s220, 1
          %s2882 = sand.u32 %s220, 1
          %s2883 = smul.addr %s2882, 48
          %s2884 = scalar_lea.vmem [#allocation13], %s2883
        $region119: #{adaln_single_forward.1} parent=114 // pred_fallthru
          _
      $region115: #{adaln_single_forward.1} parent=5 // pred_fallthru
        _
    $region6: #{adaln_single_forward.1} parent=1 // loop_footer
      %s24 = sadd.s32 1, %s20
    $region7: #{adaln_single_forward.1} parent=1 // loop_footer_branch
      %19 = sbr.rel target = $region3
    $region8: #{adaln_single_forward.1} parent=1 // loop_exit
      _
    %2885 = vsyncpa [#allocation3], 1
    %s2886 = scalar_lea.sflag [#allocation3], 1
    %2887 = vsyncpa %s2886, 1
    %2888 = vsyncpa [#allocation5], 1
    %2889 = vsyncpa [#allocation8], 1
    %2890 = vsyncpa [#allocation11], 1
    %s2891 = scalar_lea.sflag [#allocation11], 1
    %2892 = vsyncpa %s2891, 1

</llo_original>
